<compile_context>
chip_gen: v6e
topology: v6e:2x2x1
jax: 0.10.0
libtpu: 0.0.40
codegen_flags: <defaults>
</compile_context>

<pallas_src>
import jax
import jax.numpy as jnp
from jax.experimental import pallas as pl
from jax.experimental.pallas import tpu as pltpu

LANE = 128
SUBLANE = 8


def _round_up(n, m):
    return ((n + m - 1) // m) * m


def _lstm_kernel(x_ref, wih0_ref, whh0_ref, b0_ref, wih1_ref, whh1_ref, b1_ref,
                 fc1w_ref, fc1b_ref, fc2w_ref, fc2b_ref, out_ref, gates_ref):
    Bp = out_ref.shape[0]
    TB = x_ref.shape[0]
    T = TB // Bp
    H = whh0_ref.shape[0]
    G = 4 * H

    # Loop-invariant loads / broadcasts hoisted out of the unrolled time loop
    # (JAX does not CSE broadcast_in_dim inside the unrolled body).
    whh0 = whh0_ref[...]                          # (H, 4H)  bf16
    wih1 = wih1_ref[...]                          # (H, 4H)  bf16
    whh1 = whh1_ref[...]                          # (H, 4H)  bf16
    b1 = jnp.broadcast_to(b1_ref[...], (Bp, G))   # (Bp, 4H) f32

    # Hoisted layer-0 input projection: one parallel MXU matmul + one bias add
    # instead of 8 serial per-step input matmuls / bias adds. Staged in VMEM so
    # the per-step slice is a cheap ref read.
    gx = jnp.dot(x_ref[...], wih0_ref[...], preferred_element_type=jnp.float32)
    gx = gx + jnp.broadcast_to(b0_ref[...], (TB, G))
    gates_ref[...] = gx.reshape(T, Bp, G)

    def gate_act(gates, c):
        # g-gate columns of W/b were pre-scaled by 2 in the wrapper, so one
        # full-vreg sigmoid serves all four gates (tanh(x) = 2*sigmoid(2x)-1).
        s = jax.nn.sigmoid(gates)                 # single EUP pass over (Bp, 4H)
        i = s[:, 0 * H:1 * H]
        f = s[:, 1 * H:2 * H]
        g = 2.0 * s[:, 2 * H:3 * H] - 1.0
        o = s[:, 3 * H:4 * H]
        c_new = f * c + i * g
        h_new = o * jnp.tanh(c_new)
        return h_new, c_new

    def step(t, carry):
        h0, c0, h1, c1 = carry
        # Layer 0: only the recurrent projection remains on the serial chain.
        g0 = gates_ref[t] + jnp.dot(h0.astype(jnp.bfloat16), whh0,
                                    preferred_element_type=jnp.float32)
        h0, c0 = gate_act(g0, c0)
        # Layer 1: two accumulated dots instead of a lane concat + one dot.
        g1 = (jnp.dot(h0.astype(jnp.bfloat16), wih1,
                      preferred_element_type=jnp.float32)
              + jnp.dot(h1.astype(jnp.bfloat16), whh1,
                        preferred_element_type=jnp.float32)
              + b1)
        h1, c1 = gate_act(g1, c1)
        return h0, c0, h1, c1

    zeros = jnp.zeros((Bp, H), jnp.float32)
    _, _, h1, _ = jax.lax.fori_loop(0, T, step, (zeros, zeros, zeros, zeros),
                                    unroll=True)

    # Fused head: relu(fc1(h_T)) @ fc2. Both layers are padded to 128 output
    # lanes so z and the final store are unmasked, lane-dense vector ops.
    z = jnp.maximum(
        jnp.dot(h1.astype(jnp.bfloat16), fc1w_ref[...],
                preferred_element_type=jnp.float32) + fc1b_ref[...], 0.0)
    y = jnp.dot(z.astype(jnp.bfloat16), fc2w_ref[...],
                preferred_element_type=jnp.float32) + fc2b_ref[...]
    out_ref[...] = y.astype(out_ref.dtype)


def _scale_g_gate(w, H):
    """Pre-scale the g-gate (cell-candidate) columns by 2: tanh(x)=2*sig(2x)-1."""
    return w.at[..., 2 * H:3 * H].multiply(2.0)


def lstm_forward(x, params):
    """x: (B, T, D_in) float32 (batch_first). Returns (B, 1) float32."""
    B, T, D_in = x.shape
    H = params["whh0"].shape[0]
    G = 4 * H
    F1 = params["fc1w"].shape[1]

    Bp = max(SUBLANE, _round_up(B, SUBLANE))      # pad batch to f32 sublane tile
    Dp = _round_up(D_in, 32)                      # sublane-align the K of Wih0

    # Time-major, batch/feature-padded input, flattened to (T*Bp, Dp) so the
    # layer-0 input projection is a single matmul inside the kernel.
    x_p = jnp.zeros((T, Bp, Dp), jnp.float32)
    x_p = x_p.at[:, :B, :D_in].set(jnp.transpose(x, (1, 0, 2)))
    x_flat = x_p.reshape(T * Bp, Dp).astype(jnp.bfloat16)

    # MXU operands in bf16 (accumulation stays f32 via preferred_element_type);
    # g-gate columns pre-scaled by 2 for the single-sigmoid gate trick.
    wih0 = jnp.zeros((Dp, G), jnp.float32).at[:D_in].set(
        _scale_g_gate(params["wih0"], H)).astype(jnp.bfloat16)
    whh0 = _scale_g_gate(params["whh0"], H).astype(jnp.bfloat16)
    b0 = _scale_g_gate(params["b0"], H)                          # f32
    wih1 = _scale_g_gate(params["wih1"], H).astype(jnp.bfloat16)
    whh1 = _scale_g_gate(params["whh1"], H).astype(jnp.bfloat16)
    b1 = _scale_g_gate(params["b1"], H)                          # f32

    # Head weights/biases padded to full 128-lane outputs (zero extra columns /
    # rows) so z and the output slab are lane-dense.
    fc1w = jnp.zeros((H, LANE), jnp.float32).at[:, :F1].set(
        params["fc1w"]).astype(jnp.bfloat16)
    fc1b = jnp.zeros((1, LANE), jnp.float32).at[:, :F1].set(params["fc1b"])
    fc2w = jnp.zeros((LANE, LANE), jnp.float32).at[:F1, :1].set(
        params["fc2w"]).astype(jnp.bfloat16)
    fc2b = jnp.zeros((1, LANE), jnp.float32).at[:, :1].set(params["fc2b"])

    vmem = pl.BlockSpec(memory_space=pltpu.MemorySpace.VMEM)
    out = pl.pallas_call(
        _lstm_kernel,
        out_shape=jax.ShapeDtypeStruct((Bp, LANE), jnp.float32),
        in_specs=[vmem] * 11,
        out_specs=vmem,
        scratch_shapes=[pltpu.VMEM((T, Bp, G), jnp.float32)],
    )(x_flat, wih0, whh0, b0, wih1, whh1, b1, fc1w, fc1b, fc2w, fc2b)

    return out[:B, :1]


def _ref_forward(x, params):
    """Pure-JAX f32 reference of the PyTorch module forward."""
    B, T, _ = x.shape
    H = params["whh0"].shape[0]

    def cell(x_in, h, c, wih, whh, b):
        gates = x_in @ wih + h @ whh + b
        i = jax.nn.sigmoid(gates[:, 0 * H:1 * H])
        f = jax.nn.sigmoid(gates[:, 1 * H:2 * H])
        g = jnp.tanh(gates[:, 2 * H:3 * H])
        o = jax.nn.sigmoid(gates[:, 3 * H:4 * H])
        c_new = f * c + i * g
        return o * jnp.tanh(c_new), c_new

    h0 = jnp.zeros((B, H), jnp.float32)
    c0 = jnp.zeros((B, H), jnp.float32)
    h1 = jnp.zeros((B, H), jnp.float32)
    c1 = jnp.zeros((B, H), jnp.float32)
    for t in range(T):
        h0, c0 = cell(x[:, t, :], h0, c0, params["wih0"], params["whh0"], params["b0"])
        h1, c1 = cell(h0, h1, c1, params["wih1"], params["whh1"], params["b1"])
    z = jnp.maximum(h1 @ params["fc1w"] + params["fc1b"], 0.0)
    return z @ params["fc2w"] + params["fc2b"]


def init_params(key, input_dim, hidden_dim):
    """Deterministic synthetic parameters (PyTorch-shaped, stored transposed).

    Note: real PyTorch LSTMs carry separate b_ih/b_hh per layer; a single
    combined bias is used here (sum them when porting trained weights).
    """
    ks = jax.random.split(key, 10)
    H = hidden_dim
    s = 0.1

    def rnd(k, shape):
        return jax.random.normal(k, shape, jnp.float32) * s

    return {
        # layer 0: W_ih (D_in, 4H), W_hh (H, 4H), combined bias (1, 4H)
        "wih0": rnd(ks[0], (input_dim, 4 * H)),
        "whh0": rnd(ks[1], (H, 4 * H)),
        "b0": rnd(ks[2], (1, 4 * H)),
        # layer 1: input is layer-0 hidden state
        "wih1": rnd(ks[3], (H, 4 * H)),
        "whh1": rnd(ks[4], (H, 4 * H)),
        "b1": rnd(ks[5], (1, 4 * H)),
        # head: Linear(H, 16) -> relu -> Linear(16, 1)
        "fc1w": rnd(ks[6], (H, 16)),
        "fc1b": rnd(ks[7], (1, 16)),
        "fc2w": rnd(ks[8], (16, 1)),
        "fc2b": rnd(ks[9], (1, 1)),
    }


if __name__ == "__main__":
    # Small shapes: batch=2, seq=8, input_dim=23 (from the module), hidden=32, 2 layers.
    B, T, D_IN, H = 2, 8, 23, 32

    key = jax.random.PRNGKey(0)
    kx, kp = jax.random.split(key)
    x = jax.random.normal(kx, (B, T, D_IN), jnp.float32)
    params = init_params(kp, D_IN, H)

    out = jax.block_until_ready(lstm_forward(x, params))
    ref = _ref_forward(x, params)

    assert out.shape == (B, 1)
    # Tolerances loosened slightly vs a pure-f32 kernel: the MXU operands are
    # bf16 (f32 accumulate), which drifts ~1e-3 vs the f32 reference over the
    # 8-step recurrence.
    assert jnp.allclose(out, ref, rtol=1e-2, atol=5e-3), (out, ref)
    print("KERNEL_OK")
</pallas_src>

<mosaic_0001>
module attributes {stable_mosaic.version = 11 : i64} {
  func.func @_lstm_kernel(%arg0: memref<64x32xbf16, #tpu.memory_space<vmem>>, %arg1: memref<32x128xbf16, #tpu.memory_space<vmem>>, %arg2: memref<32x128xbf16, #tpu.memory_space<vmem>>, %arg3: memref<1x128xf32, #tpu.memory_space<vmem>>, %arg4: memref<32x128xbf16, #tpu.memory_space<vmem>>, %arg5: memref<32x128xbf16, #tpu.memory_space<vmem>>, %arg6: memref<1x128xf32, #tpu.memory_space<vmem>>, %arg7: memref<32x128xbf16, #tpu.memory_space<vmem>>, %arg8: memref<1x128xf32, #tpu.memory_space<vmem>>, %arg9: memref<128x128xbf16, #tpu.memory_space<vmem>>, %arg10: memref<1x128xf32, #tpu.memory_space<vmem>>, %arg11: memref<8x128xf32, #tpu.memory_space<vmem>>, %arg12: memref<8x8x128xf32, #tpu.memory_space<vmem>>) attributes {dimension_semantics = [], scalar_prefetch = 0 : i64, scratch_operands = 1 : i64, tpu.core_type = #tpu.core_type<tc>} {
    %c0 = arith.constant 0 : index
    %c0_0 = arith.constant 0 : index
    %0 = vector.load %arg2[%c0, %c0_0] : memref<32x128xbf16, #tpu.memory_space<vmem>>, vector<32x128xbf16>
    %c0_1 = arith.constant 0 : index
    %c0_2 = arith.constant 0 : index
    %1 = vector.load %arg4[%c0_1, %c0_2] : memref<32x128xbf16, #tpu.memory_space<vmem>>, vector<32x128xbf16>
    %c0_3 = arith.constant 0 : index
    %c0_4 = arith.constant 0 : index
    %2 = vector.load %arg5[%c0_3, %c0_4] : memref<32x128xbf16, #tpu.memory_space<vmem>>, vector<32x128xbf16>
    %c0_5 = arith.constant 0 : index
    %c0_6 = arith.constant 0 : index
    %3 = vector.load %arg6[%c0_5, %c0_6] : memref<1x128xf32, #tpu.memory_space<vmem>>, vector<1x128xf32>
    %4 = vector.shape_cast %3 : vector<1x128xf32> to vector<1x128xf32>
    %5 = vector.broadcast %4 : vector<1x128xf32> to vector<8x128xf32>
    %c0_7 = arith.constant 0 : index
    %c0_8 = arith.constant 0 : index
    %6 = vector.load %arg0[%c0_7, %c0_8] : memref<64x32xbf16, #tpu.memory_space<vmem>>, vector<64x32xbf16>
    %c0_9 = arith.constant 0 : index
    %c0_10 = arith.constant 0 : index
    %7 = vector.load %arg1[%c0_9, %c0_10] : memref<32x128xbf16, #tpu.memory_space<vmem>>, vector<32x128xbf16>
    %cst = arith.constant dense<0.000000e+00> : vector<64x128xf32>
    %8 = tpu.matmul %6, %7, %cst {dimension_numbers = #tpu.dot_dimension_numbers<[1], [0], [0], [1], [0, 0, 1, 1], [], []>} : vector<64x32xbf16>, vector<32x128xbf16>, vector<64x128xf32> -> vector<64x128xf32>
    %c0_11 = arith.constant 0 : index
    %c0_12 = arith.constant 0 : index
    %9 = vector.load %arg3[%c0_11, %c0_12] : memref<1x128xf32, #tpu.memory_space<vmem>>, vector<1x128xf32>
    %10 = vector.shape_cast %9 : vector<1x128xf32> to vector<1x128xf32>
    %11 = vector.broadcast %10 : vector<1x128xf32> to vector<64x128xf32>
    %12 = arith.addf %8, %11 : vector<64x128xf32>
    %13 = vector.shape_cast %12 : vector<64x128xf32> to vector<8x8x128xf32>
    %c0_13 = arith.constant 0 : index
    %c0_14 = arith.constant 0 : index
    %c0_15 = arith.constant 0 : index
    %14 = vector.load %arg12[%c0_13, %c0_14, %c0_15] : memref<8x8x128xf32, #tpu.memory_space<vmem>>, vector<8x8x128xf32>
    tpu.vector_store %arg12[%c0_13, %c0_14, %c0_15], %13 {strides = array<i32>} : memref<8x8x128xf32, #tpu.memory_space<vmem>>, vector<8x8x128xf32>,
    %cst_16 = arith.constant 0.000000e+00 : f32
    %15 = vector.broadcast %cst_16 : f32 to vector<8x32xf32>
    %c0_i32 = arith.constant 0 : i32
    %16 = arith.index_cast %c0_i32 : i32 to index
    %c0_17 = arith.constant 0 : index
    %c0_18 = arith.constant 0 : index
    %17 = vector.load %arg12[%16, %c0_17, %c0_18] : memref<8x8x128xf32, #tpu.memory_space<vmem>>, vector<1x8x128xf32>
    %18 = vector.shape_cast %17 : vector<1x8x128xf32> to vector<8x128xf32>
    %19 = arith.truncf %15 : vector<8x32xf32> to vector<8x32xbf16>
    %cst_19 = arith.constant dense<0.000000e+00> : vector<8x128xf32>
    %20 = tpu.matmul %19, %0, %cst_19 {dimension_numbers = #tpu.dot_dimension_numbers<[1], [0], [0], [1], [0, 0, 1, 1], [], []>} : vector<8x32xbf16>, vector<32x128xbf16>, vector<8x128xf32> -> vector<8x128xf32>
    %21 = arith.addf %18, %20 : vector<8x128xf32>
    %22 = arith.negf %21 : vector<8x128xf32>
    %23 = math.exp %22 : vector<8x128xf32>
    %cst_20 = arith.constant 1.000000e+00 : f32
    %24 = vector.broadcast %cst_20 : f32 to vector<8x128xf32>
    %25 = arith.addf %24, %23 : vector<8x128xf32>
    %26 = arith.divf %24, %25 : vector<8x128xf32>
    %27 = vector.extract_strided_slice %26 {offsets = [0, 0], sizes = [8, 32], strides = [1, 1]} : vector<8x128xf32> to vector<8x32xf32>
    %28 = vector.extract_strided_slice %26 {offsets = [0, 32], sizes = [8, 32], strides = [1, 1]} : vector<8x128xf32> to vector<8x32xf32>
    %29 = vector.extract_strided_slice %26 {offsets = [0, 64], sizes = [8, 32], strides = [1, 1]} : vector<8x128xf32> to vector<8x32xf32>
    %cst_21 = arith.constant 2.000000e+00 : f32
    %30 = vector.broadcast %cst_21 : f32 to vector<8x32xf32>
    %31 = arith.mulf %30, %29 : vector<8x32xf32>
    %cst_22 = arith.constant 1.000000e+00 : f32
    %32 = vector.broadcast %cst_22 : f32 to vector<8x32xf32>
    %33 = arith.subf %31, %32 : vector<8x32xf32>
    %34 = vector.extract_strided_slice %26 {offsets = [0, 96], sizes = [8, 32], strides = [1, 1]} : vector<8x128xf32> to vector<8x32xf32>
    %35 = arith.mulf %28, %15 : vector<8x32xf32>
    %36 = arith.mulf %27, %33 : vector<8x32xf32>
    %37 = arith.addf %35, %36 : vector<8x32xf32>
    %38 = math.tanh %37 : vector<8x32xf32>
    %39 = arith.mulf %34, %38 : vector<8x32xf32>
    %40 = arith.truncf %39 : vector<8x32xf32> to vector<8x32xbf16>
    %cst_23 = arith.constant dense<0.000000e+00> : vector<8x128xf32>
    %41 = tpu.matmul %40, %1, %cst_23 {dimension_numbers = #tpu.dot_dimension_numbers<[1], [0], [0], [1], [0, 0, 1, 1], [], []>} : vector<8x32xbf16>, vector<32x128xbf16>, vector<8x128xf32> -> vector<8x128xf32>
    %42 = arith.truncf %15 : vector<8x32xf32> to vector<8x32xbf16>
    %cst_24 = arith.constant dense<0.000000e+00> : vector<8x128xf32>
    %43 = tpu.matmul %42, %2, %cst_24 {dimension_numbers = #tpu.dot_dimension_numbers<[1], [0], [0], [1], [0, 0, 1, 1], [], []>} : vector<8x32xbf16>, vector<32x128xbf16>, vector<8x128xf32> -> vector<8x128xf32>
    %44 = arith.addf %41, %43 : vector<8x128xf32>
    %45 = arith.addf %44, %5 : vector<8x128xf32>
    %46 = arith.negf %45 : vector<8x128xf32>
    %47 = math.exp %46 : vector<8x128xf32>
    %cst_25 = arith.constant 1.000000e+00 : f32
    %48 = vector.broadcast %cst_25 : f32 to vector<8x128xf32>
    %49 = arith.addf %48, %47 : vector<8x128xf32>
    %50 = arith.divf %48, %49 : vector<8x128xf32>
    %51 = vector.extract_strided_slice %50 {offsets = [0, 0], sizes = [8, 32], strides = [1, 1]} : vector<8x128xf32> to vector<8x32xf32>
    %52 = vector.extract_strided_slice %50 {offsets = [0, 32], sizes = [8, 32], strides = [1, 1]} : vector<8x128xf32> to vector<8x32xf32>
    %53 = vector.extract_strided_slice %50 {offsets = [0, 64], sizes = [8, 32], strides = [1, 1]} : vector<8x128xf32> to vector<8x32xf32>
    %cst_26 = arith.constant 2.000000e+00 : f32
    %54 = vector.broadcast %cst_26 : f32 to vector<8x32xf32>
    %55 = arith.mulf %54, %53 : vector<8x32xf32>
    %cst_27 = arith.constant 1.000000e+00 : f32
    %56 = vector.broadcast %cst_27 : f32 to vector<8x32xf32>
    %57 = arith.subf %55, %56 : vector<8x32xf32>
    %58 = vector.extract_strided_slice %50 {offsets = [0, 96], sizes = [8, 32], strides = [1, 1]} : vector<8x128xf32> to vector<8x32xf32>
    %59 = arith.mulf %52, %15 : vector<8x32xf32>
    %60 = arith.mulf %51, %57 : vector<8x32xf32>
    %61 = arith.addf %59, %60 : vector<8x32xf32>
    %62 = math.tanh %61 : vector<8x32xf32>
    %63 = arith.mulf %58, %62 : vector<8x32xf32>
    %c1_i32 = arith.constant 1 : i32
    %64 = arith.index_cast %c1_i32 : i32 to index
    %c0_28 = arith.constant 0 : index
    %c0_29 = arith.constant 0 : index
    %65 = vector.load %arg12[%64, %c0_28, %c0_29] : memref<8x8x128xf32, #tpu.memory_space<vmem>>, vector<1x8x128xf32>
    %66 = vector.shape_cast %65 : vector<1x8x128xf32> to vector<8x128xf32>
    %67 = arith.truncf %39 : vector<8x32xf32> to vector<8x32xbf16>
    %cst_30 = arith.constant dense<0.000000e+00> : vector<8x128xf32>
    %68 = tpu.matmul %67, %0, %cst_30 {dimension_numbers = #tpu.dot_dimension_numbers<[1], [0], [0], [1], [0, 0, 1, 1], [], []>} : vector<8x32xbf16>, vector<32x128xbf16>, vector<8x128xf32> -> vector<8x128xf32>
    %69 = arith.addf %66, %68 : vector<8x128xf32>
    %70 = arith.negf %69 : vector<8x128xf32>
    %71 = math.exp %70 : vector<8x128xf32>
    %cst_31 = arith.constant 1.000000e+00 : f32
    %72 = vector.broadcast %cst_31 : f32 to vector<8x128xf32>
    %73 = arith.addf %72, %71 : vector<8x128xf32>
    %74 = arith.divf %72, %73 : vector<8x128xf32>
    %75 = vector.extract_strided_slice %74 {offsets = [0, 0], sizes = [8, 32], strides = [1, 1]} : vector<8x128xf32> to vector<8x32xf32>
    %76 = vector.extract_strided_slice %74 {offsets = [0, 32], sizes = [8, 32], strides = [1, 1]} : vector<8x128xf32> to vector<8x32xf32>
    %77 = vector.extract_strided_slice %74 {offsets = [0, 64], sizes = [8, 32], strides = [1, 1]} : vector<8x128xf32> to vector<8x32xf32>
    %cst_32 = arith.constant 2.000000e+00 : f32
    %78 = vector.broadcast %cst_32 : f32 to vector<8x32xf32>
    %79 = arith.mulf %78, %77 : vector<8x32xf32>
    %cst_33 = arith.constant 1.000000e+00 : f32
    %80 = vector.broadcast %cst_33 : f32 to vector<8x32xf32>
    %81 = arith.subf %79, %80 : vector<8x32xf32>
    %82 = vector.extract_strided_slice %74 {offsets = [0, 96], sizes = [8, 32], strides = [1, 1]} : vector<8x128xf32> to vector<8x32xf32>
    %83 = arith.mulf %76, %37 : vector<8x32xf32>
    %84 = arith.mulf %75, %81 : vector<8x32xf32>
    %85 = arith.addf %83, %84 : vector<8x32xf32>
    %86 = math.tanh %85 : vector<8x32xf32>
    %87 = arith.mulf %82, %86 : vector<8x32xf32>
    %88 = arith.truncf %87 : vector<8x32xf32> to vector<8x32xbf16>
    %cst_34 = arith.constant dense<0.000000e+00> : vector<8x128xf32>
    %89 = tpu.matmul %88, %1, %cst_34 {dimension_numbers = #tpu.dot_dimension_numbers<[1], [0], [0], [1], [0, 0, 1, 1], [], []>} : vector<8x32xbf16>, vector<32x128xbf16>, vector<8x128xf32> -> vector<8x128xf32>
    %90 = arith.truncf %63 : vector<8x32xf32> to vector<8x32xbf16>
    %cst_35 = arith.constant dense<0.000000e+00> : vector<8x128xf32>
    %91 = tpu.matmul %90, %2, %cst_35 {dimension_numbers = #tpu.dot_dimension_numbers<[1], [0], [0], [1], [0, 0, 1, 1], [], []>} : vector<8x32xbf16>, vector<32x128xbf16>, vector<8x128xf32> -> vector<8x128xf32>
    %92 = arith.addf %89, %91 : vector<8x128xf32>
    %93 = arith.addf %92, %5 : vector<8x128xf32>
    %94 = arith.negf %93 : vector<8x128xf32>
    %95 = math.exp %94 : vector<8x128xf32>
    %cst_36 = arith.constant 1.000000e+00 : f32
    %96 = vector.broadcast %cst_36 : f32 to vector<8x128xf32>
    %97 = arith.addf %96, %95 : vector<8x128xf32>
    %98 = arith.divf %96, %97 : vector<8x128xf32>
    %99 = vector.extract_strided_slice %98 {offsets = [0, 0], sizes = [8, 32], strides = [1, 1]} : vector<8x128xf32> to vector<8x32xf32>
    %100 = vector.extract_strided_slice %98 {offsets = [0, 32], sizes = [8, 32], strides = [1, 1]} : vector<8x128xf32> to vector<8x32xf32>
    %101 = vector.extract_strided_slice %98 {offsets = [0, 64], sizes = [8, 32], strides = [1, 1]} : vector<8x128xf32> to vector<8x32xf32>
    %cst_37 = arith.constant 2.000000e+00 : f32
    %102 = vector.broadcast %cst_37 : f32 to vector<8x32xf32>
    %103 = arith.mulf %102, %101 : vector<8x32xf32>
    %cst_38 = arith.constant 1.000000e+00 : f32
    %104 = vector.broadcast %cst_38 : f32 to vector<8x32xf32>
    %105 = arith.subf %103, %104 : vector<8x32xf32>
    %106 = vector.extract_strided_slice %98 {offsets = [0, 96], sizes = [8, 32], strides = [1, 1]} : vector<8x128xf32> to vector<8x32xf32>
    %107 = arith.mulf %100, %61 : vector<8x32xf32>
    %108 = arith.mulf %99, %105 : vector<8x32xf32>
    %109 = arith.addf %107, %108 : vector<8x32xf32>
    %110 = math.tanh %109 : vector<8x32xf32>
    %111 = arith.mulf %106, %110 : vector<8x32xf32>
    %c2_i32 = arith.constant 2 : i32
    %112 = arith.index_cast %c2_i32 : i32 to index
    %c0_39 = arith.constant 0 : index
    %c0_40 = arith.constant 0 : index
    %113 = vector.load %arg12[%112, %c0_39, %c0_40] : memref<8x8x128xf32, #tpu.memory_space<vmem>>, vector<1x8x128xf32>
    %114 = vector.shape_cast %113 : vector<1x8x128xf32> to vector<8x128xf32>
    %115 = arith.truncf %87 : vector<8x32xf32> to vector<8x32xbf16>
    %cst_41 = arith.constant dense<0.000000e+00> : vector<8x128xf32>
    %116 = tpu.matmul %115, %0, %cst_41 {dimension_numbers = #tpu.dot_dimension_numbers<[1], [0], [0], [1], [0, 0, 1, 1], [], []>} : vector<8x32xbf16>, vector<32x128xbf16>, vector<8x128xf32> -> vector<8x128xf32>
    %117 = arith.addf %114, %116 : vector<8x128xf32>
    %118 = arith.negf %117 : vector<8x128xf32>
    %119 = math.exp %118 : vector<8x128xf32>
    %cst_42 = arith.constant 1.000000e+00 : f32
    %120 = vector.broadcast %cst_42 : f32 to vector<8x128xf32>
    %121 = arith.addf %120, %119 : vector<8x128xf32>
    %122 = arith.divf %120, %121 : vector<8x128xf32>
    %123 = vector.extract_strided_slice %122 {offsets = [0, 0], sizes = [8, 32], strides = [1, 1]} : vector<8x128xf32> to vector<8x32xf32>
    %124 = vector.extract_strided_slice %122 {offsets = [0, 32], sizes = [8, 32], strides = [1, 1]} : vector<8x128xf32> to vector<8x32xf32>
    %125 = vector.extract_strided_slice %122 {offsets = [0, 64], sizes = [8, 32], strides = [1, 1]} : vector<8x128xf32> to vector<8x32xf32>
    %cst_43 = arith.constant 2.000000e+00 : f32
    %126 = vector.broadcast %cst_43 : f32 to vector<8x32xf32>
    %127 = arith.mulf %126, %125 : vector<8x32xf32>
    %cst_44 = arith.constant 1.000000e+00 : f32
    %128 = vector.broadcast %cst_44 : f32 to vector<8x32xf32>
    %129 = arith.subf %127, %128 : vector<8x32xf32>
    %130 = vector.extract_strided_slice %122 {offsets = [0, 96], sizes = [8, 32], strides = [1, 1]} : vector<8x128xf32> to vector<8x32xf32>
    %131 = arith.mulf %124, %85 : vector<8x32xf32>
    %132 = arith.mulf %123, %129 : vector<8x32xf32>
    %133 = arith.addf %131, %132 : vector<8x32xf32>
    %134 = math.tanh %133 : vector<8x32xf32>
    %135 = arith.mulf %130, %134 : vector<8x32xf32>
    %136 = arith.truncf %135 : vector<8x32xf32> to vector<8x32xbf16>
    %cst_45 = arith.constant dense<0.000000e+00> : vector<8x128xf32>
    %137 = tpu.matmul %136, %1, %cst_45 {dimension_numbers = #tpu.dot_dimension_numbers<[1], [0], [0], [1], [0, 0, 1, 1], [], []>} : vector<8x32xbf16>, vector<32x128xbf16>, vector<8x128xf32> -> vector<8x128xf32>
    %138 = arith.truncf %111 : vector<8x32xf32> to vector<8x32xbf16>
    %cst_46 = arith.constant dense<0.000000e+00> : vector<8x128xf32>
    %139 = tpu.matmul %138, %2, %cst_46 {dimension_numbers = #tpu.dot_dimension_numbers<[1], [0], [0], [1], [0, 0, 1, 1], [], []>} : vector<8x32xbf16>, vector<32x128xbf16>, vector<8x128xf32> -> vector<8x128xf32>
    %140 = arith.addf %137, %139 : vector<8x128xf32>
    %141 = arith.addf %140, %5 : vector<8x128xf32>
    %142 = arith.negf %141 : vector<8x128xf32>
    %143 = math.exp %142 : vector<8x128xf32>
    %cst_47 = arith.constant 1.000000e+00 : f32
    %144 = vector.broadcast %cst_47 : f32 to vector<8x128xf32>
    %145 = arith.addf %144, %143 : vector<8x128xf32>
    %146 = arith.divf %144, %145 : vector<8x128xf32>
    %147 = vector.extract_strided_slice %146 {offsets = [0, 0], sizes = [8, 32], strides = [1, 1]} : vector<8x128xf32> to vector<8x32xf32>
    %148 = vector.extract_strided_slice %146 {offsets = [0, 32], sizes = [8, 32], strides = [1, 1]} : vector<8x128xf32> to vector<8x32xf32>
    %149 = vector.extract_strided_slice %146 {offsets = [0, 64], sizes = [8, 32], strides = [1, 1]} : vector<8x128xf32> to vector<8x32xf32>
    %cst_48 = arith.constant 2.000000e+00 : f32
    %150 = vector.broadcast %cst_48 : f32 to vector<8x32xf32>
    %151 = arith.mulf %150, %149 : vector<8x32xf32>
    %cst_49 = arith.constant 1.000000e+00 : f32
    %152 = vector.broadcast %cst_49 : f32 to vector<8x32xf32>
    %153 = arith.subf %151, %152 : vector<8x32xf32>
    %154 = vector.extract_strided_slice %146 {offsets = [0, 96], sizes = [8, 32], strides = [1, 1]} : vector<8x128xf32> to vector<8x32xf32>
    %155 = arith.mulf %148, %109 : vector<8x32xf32>
    %156 = arith.mulf %147, %153 : vector<8x32xf32>
    %157 = arith.addf %155, %156 : vector<8x32xf32>
    %158 = math.tanh %157 : vector<8x32xf32>
    %159 = arith.mulf %154, %158 : vector<8x32xf32>
    %c3_i32 = arith.constant 3 : i32
    %160 = arith.index_cast %c3_i32 : i32 to index
    %c0_50 = arith.constant 0 : index
    %c0_51 = arith.constant 0 : index
    %161 = vector.load %arg12[%160, %c0_50, %c0_51] : memref<8x8x128xf32, #tpu.memory_space<vmem>>, vector<1x8x128xf32>
    %162 = vector.shape_cast %161 : vector<1x8x128xf32> to vector<8x128xf32>
    %163 = arith.truncf %135 : vector<8x32xf32> to vector<8x32xbf16>
    %cst_52 = arith.constant dense<0.000000e+00> : vector<8x128xf32>
    %164 = tpu.matmul %163, %0, %cst_52 {dimension_numbers = #tpu.dot_dimension_numbers<[1], [0], [0], [1], [0, 0, 1, 1], [], []>} : vector<8x32xbf16>, vector<32x128xbf16>, vector<8x128xf32> -> vector<8x128xf32>
    %165 = arith.addf %162, %164 : vector<8x128xf32>
    %166 = arith.negf %165 : vector<8x128xf32>
    %167 = math.exp %166 : vector<8x128xf32>
    %cst_53 = arith.constant 1.000000e+00 : f32
    %168 = vector.broadcast %cst_53 : f32 to vector<8x128xf32>
    %169 = arith.addf %168, %167 : vector<8x128xf32>
    %170 = arith.divf %168, %169 : vector<8x128xf32>
    %171 = vector.extract_strided_slice %170 {offsets = [0, 0], sizes = [8, 32], strides = [1, 1]} : vector<8x128xf32> to vector<8x32xf32>
    %172 = vector.extract_strided_slice %170 {offsets = [0, 32], sizes = [8, 32], strides = [1, 1]} : vector<8x128xf32> to vector<8x32xf32>
    %173 = vector.extract_strided_slice %170 {offsets = [0, 64], sizes = [8, 32], strides = [1, 1]} : vector<8x128xf32> to vector<8x32xf32>
    %cst_54 = arith.constant 2.000000e+00 : f32
    %174 = vector.broadcast %cst_54 : f32 to vector<8x32xf32>
    %175 = arith.mulf %174, %173 : vector<8x32xf32>
    %cst_55 = arith.constant 1.000000e+00 : f32
    %176 = vector.broadcast %cst_55 : f32 to vector<8x32xf32>
    %177 = arith.subf %175, %176 : vector<8x32xf32>
    %178 = vector.extract_strided_slice %170 {offsets = [0, 96], sizes = [8, 32], strides = [1, 1]} : vector<8x128xf32> to vector<8x32xf32>
    %179 = arith.mulf %172, %133 : vector<8x32xf32>
    %180 = arith.mulf %171, %177 : vector<8x32xf32>
    %181 = arith.addf %179, %180 : vector<8x32xf32>
    %182 = math.tanh %181 : vector<8x32xf32>
    %183 = arith.mulf %178, %182 : vector<8x32xf32>
    %184 = arith.truncf %183 : vector<8x32xf32> to vector<8x32xbf16>
    %cst_56 = arith.constant dense<0.000000e+00> : vector<8x128xf32>
    %185 = tpu.matmul %184, %1, %cst_56 {dimension_numbers = #tpu.dot_dimension_numbers<[1], [0], [0], [1], [0, 0, 1, 1], [], []>} : vector<8x32xbf16>, vector<32x128xbf16>, vector<8x128xf32> -> vector<8x128xf32>
    %186 = arith.truncf %159 : vector<8x32xf32> to vector<8x32xbf16>
    %cst_57 = arith.constant dense<0.000000e+00> : vector<8x128xf32>
    %187 = tpu.matmul %186, %2, %cst_57 {dimension_numbers = #tpu.dot_dimension_numbers<[1], [0], [0], [1], [0, 0, 1, 1], [], []>} : vector<8x32xbf16>, vector<32x128xbf16>, vector<8x128xf32> -> vector<8x128xf32>
    %188 = arith.addf %185, %187 : vector<8x128xf32>
    %189 = arith.addf %188, %5 : vector<8x128xf32>
    %190 = arith.negf %189 : vector<8x128xf32>
    %191 = math.exp %190 : vector<8x128xf32>
    %cst_58 = arith.constant 1.000000e+00 : f32
    %192 = vector.broadcast %cst_58 : f32 to vector<8x128xf32>
    %193 = arith.addf %192, %191 : vector<8x128xf32>
    %194 = arith.divf %192, %193 : vector<8x128xf32>
    %195 = vector.extract_strided_slice %194 {offsets = [0, 0], sizes = [8, 32], strides = [1, 1]} : vector<8x128xf32> to vector<8x32xf32>
    %196 = vector.extract_strided_slice %194 {offsets = [0, 32], sizes = [8, 32], strides = [1, 1]} : vector<8x128xf32> to vector<8x32xf32>
    %197 = vector.extract_strided_slice %194 {offsets = [0, 64], sizes = [8, 32], strides = [1, 1]} : vector<8x128xf32> to vector<8x32xf32>
    %cst_59 = arith.constant 2.000000e+00 : f32
    %198 = vector.broadcast %cst_59 : f32 to vector<8x32xf32>
    %199 = arith.mulf %198, %197 : vector<8x32xf32>
    %cst_60 = arith.constant 1.000000e+00 : f32
    %200 = vector.broadcast %cst_60 : f32 to vector<8x32xf32>
    %201 = arith.subf %199, %200 : vector<8x32xf32>
    %202 = vector.extract_strided_slice %194 {offsets = [0, 96], sizes = [8, 32], strides = [1, 1]} : vector<8x128xf32> to vector<8x32xf32>
    %203 = arith.mulf %196, %157 : vector<8x32xf32>
    %204 = arith.mulf %195, %201 : vector<8x32xf32>
    %205 = arith.addf %203, %204 : vector<8x32xf32>
    %206 = math.tanh %205 : vector<8x32xf32>
    %207 = arith.mulf %202, %206 : vector<8x32xf32>
    %c4_i32 = arith.constant 4 : i32
    %208 = arith.index_cast %c4_i32 : i32 to index
    %c0_61 = arith.constant 0 : index
    %c0_62 = arith.constant 0 : index
    %209 = vector.load %arg12[%208, %c0_61, %c0_62] : memref<8x8x128xf32, #tpu.memory_space<vmem>>, vector<1x8x128xf32>
    %210 = vector.shape_cast %209 : vector<1x8x128xf32> to vector<8x128xf32>
    %211 = arith.truncf %183 : vector<8x32xf32> to vector<8x32xbf16>
    %cst_63 = arith.constant dense<0.000000e+00> : vector<8x128xf32>
    %212 = tpu.matmul %211, %0, %cst_63 {dimension_numbers = #tpu.dot_dimension_numbers<[1], [0], [0], [1], [0, 0, 1, 1], [], []>} : vector<8x32xbf16>, vector<32x128xbf16>, vector<8x128xf32> -> vector<8x128xf32>
    %213 = arith.addf %210, %212 : vector<8x128xf32>
    %214 = arith.negf %213 : vector<8x128xf32>
    %215 = math.exp %214 : vector<8x128xf32>
    %cst_64 = arith.constant 1.000000e+00 : f32
    %216 = vector.broadcast %cst_64 : f32 to vector<8x128xf32>
    %217 = arith.addf %216, %215 : vector<8x128xf32>
    %218 = arith.divf %216, %217 : vector<8x128xf32>
    %219 = vector.extract_strided_slice %218 {offsets = [0, 0], sizes = [8, 32], strides = [1, 1]} : vector<8x128xf32> to vector<8x32xf32>
    %220 = vector.extract_strided_slice %218 {offsets = [0, 32], sizes = [8, 32], strides = [1, 1]} : vector<8x128xf32> to vector<8x32xf32>
    %221 = vector.extract_strided_slice %218 {offsets = [0, 64], sizes = [8, 32], strides = [1, 1]} : vector<8x128xf32> to vector<8x32xf32>
    %cst_65 = arith.constant 2.000000e+00 : f32
    %222 = vector.broadcast %cst_65 : f32 to vector<8x32xf32>
    %223 = arith.mulf %222, %221 : vector<8x32xf32>
    %cst_66 = arith.constant 1.000000e+00 : f32
    %224 = vector.broadcast %cst_66 : f32 to vector<8x32xf32>
    %225 = arith.subf %223, %224 : vector<8x32xf32>
    %226 = vector.extract_strided_slice %218 {offsets = [0, 96], sizes = [8, 32], strides = [1, 1]} : vector<8x128xf32> to vector<8x32xf32>
    %227 = arith.mulf %220, %181 : vector<8x32xf32>
    %228 = arith.mulf %219, %225 : vector<8x32xf32>
    %229 = arith.addf %227, %228 : vector<8x32xf32>
    %230 = math.tanh %229 : vector<8x32xf32>
    %231 = arith.mulf %226, %230 : vector<8x32xf32>
    %232 = arith.truncf %231 : vector<8x32xf32> to vector<8x32xbf16>
    %cst_67 = arith.constant dense<0.000000e+00> : vector<8x128xf32>
    %233 = tpu.matmul %232, %1, %cst_67 {dimension_numbers = #tpu.dot_dimension_numbers<[1], [0], [0], [1], [0, 0, 1, 1], [], []>} : vector<8x32xbf16>, vector<32x128xbf16>, vector<8x128xf32> -> vector<8x128xf32>
    %234 = arith.truncf %207 : vector<8x32xf32> to vector<8x32xbf16>
    %cst_68 = arith.constant dense<0.000000e+00> : vector<8x128xf32>
    %235 = tpu.matmul %234, %2, %cst_68 {dimension_numbers = #tpu.dot_dimension_numbers<[1], [0], [0], [1], [0, 0, 1, 1], [], []>} : vector<8x32xbf16>, vector<32x128xbf16>, vector<8x128xf32> -> vector<8x128xf32>
    %236 = arith.addf %233, %235 : vector<8x128xf32>
    %237 = arith.addf %236, %5 : vector<8x128xf32>
    %238 = arith.negf %237 : vector<8x128xf32>
    %239 = math.exp %238 : vector<8x128xf32>
    %cst_69 = arith.constant 1.000000e+00 : f32
    %240 = vector.broadcast %cst_69 : f32 to vector<8x128xf32>
    %241 = arith.addf %240, %239 : vector<8x128xf32>
    %242 = arith.divf %240, %241 : vector<8x128xf32>
    %243 = vector.extract_strided_slice %242 {offsets = [0, 0], sizes = [8, 32], strides = [1, 1]} : vector<8x128xf32> to vector<8x32xf32>
    %244 = vector.extract_strided_slice %242 {offsets = [0, 32], sizes = [8, 32], strides = [1, 1]} : vector<8x128xf32> to vector<8x32xf32>
    %245 = vector.extract_strided_slice %242 {offsets = [0, 64], sizes = [8, 32], strides = [1, 1]} : vector<8x128xf32> to vector<8x32xf32>
    %cst_70 = arith.constant 2.000000e+00 : f32
    %246 = vector.broadcast %cst_70 : f32 to vector<8x32xf32>
    %247 = arith.mulf %246, %245 : vector<8x32xf32>
    %cst_71 = arith.constant 1.000000e+00 : f32
    %248 = vector.broadcast %cst_71 : f32 to vector<8x32xf32>
    %249 = arith.subf %247, %248 : vector<8x32xf32>
    %250 = vector.extract_strided_slice %242 {offsets = [0, 96], sizes = [8, 32], strides = [1, 1]} : vector<8x128xf32> to vector<8x32xf32>
    %251 = arith.mulf %244, %205 : vector<8x32xf32>
    %252 = arith.mulf %243, %249 : vector<8x32xf32>
    %253 = arith.addf %251, %252 : vector<8x32xf32>
    %254 = math.tanh %253 : vector<8x32xf32>
    %255 = arith.mulf %250, %254 : vector<8x32xf32>
    %c5_i32 = arith.constant 5 : i32
    %256 = arith.index_cast %c5_i32 : i32 to index
    %c0_72 = arith.constant 0 : index
    %c0_73 = arith.constant 0 : index
    %257 = vector.load %arg12[%256, %c0_72, %c0_73] : memref<8x8x128xf32, #tpu.memory_space<vmem>>, vector<1x8x128xf32>
    %258 = vector.shape_cast %257 : vector<1x8x128xf32> to vector<8x128xf32>
    %259 = arith.truncf %231 : vector<8x32xf32> to vector<8x32xbf16>
    %cst_74 = arith.constant dense<0.000000e+00> : vector<8x128xf32>
    %260 = tpu.matmul %259, %0, %cst_74 {dimension_numbers = #tpu.dot_dimension_numbers<[1], [0], [0], [1], [0, 0, 1, 1], [], []>} : vector<8x32xbf16>, vector<32x128xbf16>, vector<8x128xf32> -> vector<8x128xf32>
    %261 = arith.addf %258, %260 : vector<8x128xf32>
    %262 = arith.negf %261 : vector<8x128xf32>
    %263 = math.exp %262 : vector<8x128xf32>
    %cst_75 = arith.constant 1.000000e+00 : f32
    %264 = vector.broadcast %cst_75 : f32 to vector<8x128xf32>
    %265 = arith.addf %264, %263 : vector<8x128xf32>
    %266 = arith.divf %264, %265 : vector<8x128xf32>
    %267 = vector.extract_strided_slice %266 {offsets = [0, 0], sizes = [8, 32], strides = [1, 1]} : vector<8x128xf32> to vector<8x32xf32>
    %268 = vector.extract_strided_slice %266 {offsets = [0, 32], sizes = [8, 32], strides = [1, 1]} : vector<8x128xf32> to vector<8x32xf32>
    %269 = vector.extract_strided_slice %266 {offsets = [0, 64], sizes = [8, 32], strides = [1, 1]} : vector<8x128xf32> to vector<8x32xf32>
    %cst_76 = arith.constant 2.000000e+00 : f32
    %270 = vector.broadcast %cst_76 : f32 to vector<8x32xf32>
    %271 = arith.mulf %270, %269 : vector<8x32xf32>
    %cst_77 = arith.constant 1.000000e+00 : f32
    %272 = vector.broadcast %cst_77 : f32 to vector<8x32xf32>
    %273 = arith.subf %271, %272 : vector<8x32xf32>
    %274 = vector.extract_strided_slice %266 {offsets = [0, 96], sizes = [8, 32], strides = [1, 1]} : vector<8x128xf32> to vector<8x32xf32>
    %275 = arith.mulf %268, %229 : vector<8x32xf32>
    %276 = arith.mulf %267, %273 : vector<8x32xf32>
    %277 = arith.addf %275, %276 : vector<8x32xf32>
    %278 = math.tanh %277 : vector<8x32xf32>
    %279 = arith.mulf %274, %278 : vector<8x32xf32>
    %280 = arith.truncf %279 : vector<8x32xf32> to vector<8x32xbf16>
    %cst_78 = arith.constant dense<0.000000e+00> : vector<8x128xf32>
    %281 = tpu.matmul %280, %1, %cst_78 {dimension_numbers = #tpu.dot_dimension_numbers<[1], [0], [0], [1], [0, 0, 1, 1], [], []>} : vector<8x32xbf16>, vector<32x128xbf16>, vector<8x128xf32> -> vector<8x128xf32>
    %282 = arith.truncf %255 : vector<8x32xf32> to vector<8x32xbf16>
    %cst_79 = arith.constant dense<0.000000e+00> : vector<8x128xf32>
    %283 = tpu.matmul %282, %2, %cst_79 {dimension_numbers = #tpu.dot_dimension_numbers<[1], [0], [0], [1], [0, 0, 1, 1], [], []>} : vector<8x32xbf16>, vector<32x128xbf16>, vector<8x128xf32> -> vector<8x128xf32>
    %284 = arith.addf %281, %283 : vector<8x128xf32>
    %285 = arith.addf %284, %5 : vector<8x128xf32>
    %286 = arith.negf %285 : vector<8x128xf32>
    %287 = math.exp %286 : vector<8x128xf32>
    %cst_80 = arith.constant 1.000000e+00 : f32
    %288 = vector.broadcast %cst_80 : f32 to vector<8x128xf32>
    %289 = arith.addf %288, %287 : vector<8x128xf32>
    %290 = arith.divf %288, %289 : vector<8x128xf32>
    %291 = vector.extract_strided_slice %290 {offsets = [0, 0], sizes = [8, 32], strides = [1, 1]} : vector<8x128xf32> to vector<8x32xf32>
    %292 = vector.extract_strided_slice %290 {offsets = [0, 32], sizes = [8, 32], strides = [1, 1]} : vector<8x128xf32> to vector<8x32xf32>
    %293 = vector.extract_strided_slice %290 {offsets = [0, 64], sizes = [8, 32], strides = [1, 1]} : vector<8x128xf32> to vector<8x32xf32>
    %cst_81 = arith.constant 2.000000e+00 : f32
    %294 = vector.broadcast %cst_81 : f32 to vector<8x32xf32>
    %295 = arith.mulf %294, %293 : vector<8x32xf32>
    %cst_82 = arith.constant 1.000000e+00 : f32
    %296 = vector.broadcast %cst_82 : f32 to vector<8x32xf32>
    %297 = arith.subf %295, %296 : vector<8x32xf32>
    %298 = vector.extract_strided_slice %290 {offsets = [0, 96], sizes = [8, 32], strides = [1, 1]} : vector<8x128xf32> to vector<8x32xf32>
    %299 = arith.mulf %292, %253 : vector<8x32xf32>
    %300 = arith.mulf %291, %297 : vector<8x32xf32>
    %301 = arith.addf %299, %300 : vector<8x32xf32>
    %302 = math.tanh %301 : vector<8x32xf32>
    %303 = arith.mulf %298, %302 : vector<8x32xf32>
    %c6_i32 = arith.constant 6 : i32
    %304 = arith.index_cast %c6_i32 : i32 to index
    %c0_83 = arith.constant 0 : index
    %c0_84 = arith.constant 0 : index
    %305 = vector.load %arg12[%304, %c0_83, %c0_84] : memref<8x8x128xf32, #tpu.memory_space<vmem>>, vector<1x8x128xf32>
    %306 = vector.shape_cast %305 : vector<1x8x128xf32> to vector<8x128xf32>
    %307 = arith.truncf %279 : vector<8x32xf32> to vector<8x32xbf16>
    %cst_85 = arith.constant dense<0.000000e+00> : vector<8x128xf32>
    %308 = tpu.matmul %307, %0, %cst_85 {dimension_numbers = #tpu.dot_dimension_numbers<[1], [0], [0], [1], [0, 0, 1, 1], [], []>} : vector<8x32xbf16>, vector<32x128xbf16>, vector<8x128xf32> -> vector<8x128xf32>
    %309 = arith.addf %306, %308 : vector<8x128xf32>
    %310 = arith.negf %309 : vector<8x128xf32>
    %311 = math.exp %310 : vector<8x128xf32>
    %cst_86 = arith.constant 1.000000e+00 : f32
    %312 = vector.broadcast %cst_86 : f32 to vector<8x128xf32>
    %313 = arith.addf %312, %311 : vector<8x128xf32>
    %314 = arith.divf %312, %313 : vector<8x128xf32>
    %315 = vector.extract_strided_slice %314 {offsets = [0, 0], sizes = [8, 32], strides = [1, 1]} : vector<8x128xf32> to vector<8x32xf32>
    %316 = vector.extract_strided_slice %314 {offsets = [0, 32], sizes = [8, 32], strides = [1, 1]} : vector<8x128xf32> to vector<8x32xf32>
    %317 = vector.extract_strided_slice %314 {offsets = [0, 64], sizes = [8, 32], strides = [1, 1]} : vector<8x128xf32> to vector<8x32xf32>
    %cst_87 = arith.constant 2.000000e+00 : f32
    %318 = vector.broadcast %cst_87 : f32 to vector<8x32xf32>
    %319 = arith.mulf %318, %317 : vector<8x32xf32>
    %cst_88 = arith.constant 1.000000e+00 : f32
    %320 = vector.broadcast %cst_88 : f32 to vector<8x32xf32>
    %321 = arith.subf %319, %320 : vector<8x32xf32>
    %322 = vector.extract_strided_slice %314 {offsets = [0, 96], sizes = [8, 32], strides = [1, 1]} : vector<8x128xf32> to vector<8x32xf32>
    %323 = arith.mulf %316, %277 : vector<8x32xf32>
    %324 = arith.mulf %315, %321 : vector<8x32xf32>
    %325 = arith.addf %323, %324 : vector<8x32xf32>
    %326 = math.tanh %325 : vector<8x32xf32>
    %327 = arith.mulf %322, %326 : vector<8x32xf32>
    %328 = arith.truncf %327 : vector<8x32xf32> to vector<8x32xbf16>
    %cst_89 = arith.constant dense<0.000000e+00> : vector<8x128xf32>
    %329 = tpu.matmul %328, %1, %cst_89 {dimension_numbers = #tpu.dot_dimension_numbers<[1], [0], [0], [1], [0, 0, 1, 1], [], []>} : vector<8x32xbf16>, vector<32x128xbf16>, vector<8x128xf32> -> vector<8x128xf32>
    %330 = arith.truncf %303 : vector<8x32xf32> to vector<8x32xbf16>
    %cst_90 = arith.constant dense<0.000000e+00> : vector<8x128xf32>
    %331 = tpu.matmul %330, %2, %cst_90 {dimension_numbers = #tpu.dot_dimension_numbers<[1], [0], [0], [1], [0, 0, 1, 1], [], []>} : vector<8x32xbf16>, vector<32x128xbf16>, vector<8x128xf32> -> vector<8x128xf32>
    %332 = arith.addf %329, %331 : vector<8x128xf32>
    %333 = arith.addf %332, %5 : vector<8x128xf32>
    %334 = arith.negf %333 : vector<8x128xf32>
    %335 = math.exp %334 : vector<8x128xf32>
    %cst_91 = arith.constant 1.000000e+00 : f32
    %336 = vector.broadcast %cst_91 : f32 to vector<8x128xf32>
    %337 = arith.addf %336, %335 : vector<8x128xf32>
    %338 = arith.divf %336, %337 : vector<8x128xf32>
    %339 = vector.extract_strided_slice %338 {offsets = [0, 0], sizes = [8, 32], strides = [1, 1]} : vector<8x128xf32> to vector<8x32xf32>
    %340 = vector.extract_strided_slice %338 {offsets = [0, 32], sizes = [8, 32], strides = [1, 1]} : vector<8x128xf32> to vector<8x32xf32>
    %341 = vector.extract_strided_slice %338 {offsets = [0, 64], sizes = [8, 32], strides = [1, 1]} : vector<8x128xf32> to vector<8x32xf32>
    %cst_92 = arith.constant 2.000000e+00 : f32
    %342 = vector.broadcast %cst_92 : f32 to vector<8x32xf32>
    %343 = arith.mulf %342, %341 : vector<8x32xf32>
    %cst_93 = arith.constant 1.000000e+00 : f32
    %344 = vector.broadcast %cst_93 : f32 to vector<8x32xf32>
    %345 = arith.subf %343, %344 : vector<8x32xf32>
    %346 = vector.extract_strided_slice %338 {offsets = [0, 96], sizes = [8, 32], strides = [1, 1]} : vector<8x128xf32> to vector<8x32xf32>
    %347 = arith.mulf %340, %301 : vector<8x32xf32>
    %348 = arith.mulf %339, %345 : vector<8x32xf32>
    %349 = arith.addf %347, %348 : vector<8x32xf32>
    %350 = math.tanh %349 : vector<8x32xf32>
    %351 = arith.mulf %346, %350 : vector<8x32xf32>
    %c7_i32 = arith.constant 7 : i32
    %352 = arith.index_cast %c7_i32 : i32 to index
    %c0_94 = arith.constant 0 : index
    %c0_95 = arith.constant 0 : index
    %353 = vector.load %arg12[%352, %c0_94, %c0_95] : memref<8x8x128xf32, #tpu.memory_space<vmem>>, vector<1x8x128xf32>
    %354 = vector.shape_cast %353 : vector<1x8x128xf32> to vector<8x128xf32>
    %355 = arith.truncf %327 : vector<8x32xf32> to vector<8x32xbf16>
    %cst_96 = arith.constant dense<0.000000e+00> : vector<8x128xf32>
    %356 = tpu.matmul %355, %0, %cst_96 {dimension_numbers = #tpu.dot_dimension_numbers<[1], [0], [0], [1], [0, 0, 1, 1], [], []>} : vector<8x32xbf16>, vector<32x128xbf16>, vector<8x128xf32> -> vector<8x128xf32>
    %357 = arith.addf %354, %356 : vector<8x128xf32>
    %358 = arith.negf %357 : vector<8x128xf32>
    %359 = math.exp %358 : vector<8x128xf32>
    %cst_97 = arith.constant 1.000000e+00 : f32
    %360 = vector.broadcast %cst_97 : f32 to vector<8x128xf32>
    %361 = arith.addf %360, %359 : vector<8x128xf32>
    %362 = arith.divf %360, %361 : vector<8x128xf32>
    %363 = vector.extract_strided_slice %362 {offsets = [0, 0], sizes = [8, 32], strides = [1, 1]} : vector<8x128xf32> to vector<8x32xf32>
    %364 = vector.extract_strided_slice %362 {offsets = [0, 32], sizes = [8, 32], strides = [1, 1]} : vector<8x128xf32> to vector<8x32xf32>
    %365 = vector.extract_strided_slice %362 {offsets = [0, 64], sizes = [8, 32], strides = [1, 1]} : vector<8x128xf32> to vector<8x32xf32>
    %cst_98 = arith.constant 2.000000e+00 : f32
    %366 = vector.broadcast %cst_98 : f32 to vector<8x32xf32>
    %367 = arith.mulf %366, %365 : vector<8x32xf32>
    %cst_99 = arith.constant 1.000000e+00 : f32
    %368 = vector.broadcast %cst_99 : f32 to vector<8x32xf32>
    %369 = arith.subf %367, %368 : vector<8x32xf32>
    %370 = vector.extract_strided_slice %362 {offsets = [0, 96], sizes = [8, 32], strides = [1, 1]} : vector<8x128xf32> to vector<8x32xf32>
    %371 = arith.mulf %364, %325 : vector<8x32xf32>
    %372 = arith.mulf %363, %369 : vector<8x32xf32>
    %373 = arith.addf %371, %372 : vector<8x32xf32>
    %374 = math.tanh %373 : vector<8x32xf32>
    %375 = arith.mulf %370, %374 : vector<8x32xf32>
    %376 = arith.truncf %375 : vector<8x32xf32> to vector<8x32xbf16>
    %cst_100 = arith.constant dense<0.000000e+00> : vector<8x128xf32>
    %377 = tpu.matmul %376, %1, %cst_100 {dimension_numbers = #tpu.dot_dimension_numbers<[1], [0], [0], [1], [0, 0, 1, 1], [], []>} : vector<8x32xbf16>, vector<32x128xbf16>, vector<8x128xf32> -> vector<8x128xf32>
    %378 = arith.truncf %351 : vector<8x32xf32> to vector<8x32xbf16>
    %cst_101 = arith.constant dense<0.000000e+00> : vector<8x128xf32>
    %379 = tpu.matmul %378, %2, %cst_101 {dimension_numbers = #tpu.dot_dimension_numbers<[1], [0], [0], [1], [0, 0, 1, 1], [], []>} : vector<8x32xbf16>, vector<32x128xbf16>, vector<8x128xf32> -> vector<8x128xf32>
    %380 = arith.addf %377, %379 : vector<8x128xf32>
    %381 = arith.addf %380, %5 : vector<8x128xf32>
    %382 = arith.negf %381 : vector<8x128xf32>
    %383 = math.exp %382 : vector<8x128xf32>
    %cst_102 = arith.constant 1.000000e+00 : f32
    %384 = vector.broadcast %cst_102 : f32 to vector<8x128xf32>
    %385 = arith.addf %384, %383 : vector<8x128xf32>
    %386 = arith.divf %384, %385 : vector<8x128xf32>
    %387 = vector.extract_strided_slice %386 {offsets = [0, 0], sizes = [8, 32], strides = [1, 1]} : vector<8x128xf32> to vector<8x32xf32>
    %388 = vector.extract_strided_slice %386 {offsets = [0, 32], sizes = [8, 32], strides = [1, 1]} : vector<8x128xf32> to vector<8x32xf32>
    %389 = vector.extract_strided_slice %386 {offsets = [0, 64], sizes = [8, 32], strides = [1, 1]} : vector<8x128xf32> to vector<8x32xf32>
    %cst_103 = arith.constant 2.000000e+00 : f32
    %390 = vector.broadcast %cst_103 : f32 to vector<8x32xf32>
    %391 = arith.mulf %390, %389 : vector<8x32xf32>
    %cst_104 = arith.constant 1.000000e+00 : f32
    %392 = vector.broadcast %cst_104 : f32 to vector<8x32xf32>
    %393 = arith.subf %391, %392 : vector<8x32xf32>
    %394 = vector.extract_strided_slice %386 {offsets = [0, 96], sizes = [8, 32], strides = [1, 1]} : vector<8x128xf32> to vector<8x32xf32>
    %395 = arith.mulf %388, %349 : vector<8x32xf32>
    %396 = arith.mulf %387, %393 : vector<8x32xf32>
    %397 = arith.addf %395, %396 : vector<8x32xf32>
    %398 = math.tanh %397 : vector<8x32xf32>
    %399 = arith.mulf %394, %398 : vector<8x32xf32>
    %c8_i32 = arith.constant 8 : i32
    %400 = arith.truncf %399 : vector<8x32xf32> to vector<8x32xbf16>
    %c0_105 = arith.constant 0 : index
    %c0_106 = arith.constant 0 : index
    %401 = vector.load %arg7[%c0_105, %c0_106] : memref<32x128xbf16, #tpu.memory_space<vmem>>, vector<32x128xbf16>
    %cst_107 = arith.constant dense<0.000000e+00> : vector<8x128xf32>
    %402 = tpu.matmul %400, %401, %cst_107 {dimension_numbers = #tpu.dot_dimension_numbers<[1], [0], [0], [1], [0, 0, 1, 1], [], []>} : vector<8x32xbf16>, vector<32x128xbf16>, vector<8x128xf32> -> vector<8x128xf32>
    %c0_108 = arith.constant 0 : index
    %c0_109 = arith.constant 0 : index
    %403 = vector.load %arg8[%c0_108, %c0_109] : memref<1x128xf32, #tpu.memory_space<vmem>>, vector<1x128xf32>
    %404 = vector.broadcast %403 : vector<1x128xf32> to vector<8x128xf32>
    %405 = arith.addf %402, %404 : vector<8x128xf32>
    %cst_110 = arith.constant 0.000000e+00 : f32
    %406 = vector.broadcast %cst_110 : f32 to vector<8x128xf32>
    %407 = arith.maximumf %405, %406 : vector<8x128xf32>
    %408 = arith.truncf %407 : vector<8x128xf32> to vector<8x128xbf16>
    %c0_111 = arith.constant 0 : index
    %c0_112 = arith.constant 0 : index
    %409 = vector.load %arg9[%c0_111, %c0_112] : memref<128x128xbf16, #tpu.memory_space<vmem>>, vector<128x128xbf16>
    %cst_113 = arith.constant dense<0.000000e+00> : vector<8x128xf32>
    %410 = tpu.matmul %408, %409, %cst_113 {dimension_numbers = #tpu.dot_dimension_numbers<[1], [0], [0], [1], [0, 0, 1, 1], [], []>} : vector<8x128xbf16>, vector<128x128xbf16>, vector<8x128xf32> -> vector<8x128xf32>
    %c0_114 = arith.constant 0 : index
    %c0_115 = arith.constant 0 : index
    %411 = vector.load %arg10[%c0_114, %c0_115] : memref<1x128xf32, #tpu.memory_space<vmem>>, vector<1x128xf32>
    %412 = vector.broadcast %411 : vector<1x128xf32> to vector<8x128xf32>
    %413 = arith.addf %410, %412 : vector<8x128xf32>
    %c0_116 = arith.constant 0 : index
    %c0_117 = arith.constant 0 : index
    %414 = vector.load %arg11[%c0_116, %c0_117] : memref<8x128xf32, #tpu.memory_space<vmem>>, vector<8x128xf32>
    tpu.vector_store %arg11[%c0_116, %c0_117], %413 {strides = array<i32>} : memref<8x128xf32, #tpu.memory_space<vmem>>, vector<8x128xf32>,
    return
  }
}

</mosaic_0001>

<llo_original>
// kernel: tpu_custom_call.1
$region0: #{tpu_custom_call.1}
  #allocation0 [shape = 'u32[]', space=smem, size = 0x4, offset = 0x4, fixed_abs, tag = 'smem constant byte address 0x4 - core index']
  #allocation1 [shape = 'u32[144,128]{1,0:T(1,128)}', space=vmem, size = 0x12000, scoped, tag = 'internal scratch']
  #allocation2 [shape = 'f32[8,8,128]{2,1,0:T(8,128)}', space=vmem, size = 0x8000, scoped, tag = 'scratch operand']
  %s0 = inlined_call_operand.vmem [shape: bf16[64,32], index: 0, kind: input, shape index: {}]
  %s1 = inlined_call_operand.hbm [shape: bf16[32,128], index: 1, kind: input, shape index: {}]
  %s2 = inlined_call_operand.hbm [shape: bf16[32,128], index: 2, kind: input, shape index: {}]
  %s3 = inlined_call_operand.hbm [shape: f32[1,128], index: 3, kind: input, shape index: {}]
  %s4 = inlined_call_operand.hbm [shape: bf16[32,128], index: 4, kind: input, shape index: {}]
  %s5 = inlined_call_operand.hbm [shape: bf16[32,128], index: 5, kind: input, shape index: {}]
  %s6 = inlined_call_operand.hbm [shape: f32[1,128], index: 6, kind: input, shape index: {}]
  %s7 = inlined_call_operand.hbm [shape: bf16[32,128], index: 7, kind: input, shape index: {}]
  %s8 = inlined_call_operand.hbm [shape: f32[1,128], index: 8, kind: input, shape index: {}]
  %s9 = inlined_call_operand.vmem [shape: bf16[128,128], index: 9, kind: input, shape index: {}]
  %s10 = inlined_call_operand.vmem [shape: f32[1,128], index: 10, kind: input, shape index: {}]
  %s11 = inlined_call_operand.hbm [shape: f32[8,128], index: 11, kind: output, shape index: {}]
  %s12 = sld [smem:[#allocation0]]
  $region86: #{tpu_custom_call.1} parent=0
    _
  %s14 = ssub.s32 1, %s12
  %s15 = scalar_select 0, %s14, %s12
  $region1: #{tpu_custom_call.1} parent=0
    #allocation3 [shape = 'u8[8192]{0}', space=vmem, size = 0x2000, scoped, tag = 'input window, operand 1, single buffered']
    #allocation4 [shape = 's32[1]{0}', space=sflag, size = 0x4, scoped, tag = 'scoped memory for tpu_custom_call.1']
    #allocation5 [shape = 's32[1]{0}', space=sflag, size = 0x4, scoped, tag = 'scoped memory for tpu_custom_call.1']
    #allocation6 [shape = 'u8[8192]{0}', space=vmem, size = 0x2000, scoped, tag = 'input window, operand 2, single buffered']
    #allocation7 [shape = 's32[1]{0}', space=sflag, size = 0x4, scoped, tag = 'scoped memory for tpu_custom_call.1']
    #allocation8 [shape = 'u8[512]{0}', space=vmem, size = 0x400, scoped, tag = 'input window, operand 3, single buffered']
    #allocation9 [shape = 'u8[8192]{0}', space=vmem, size = 0x2000, scoped, tag = 'input window, operand 4, single buffered']
    #allocation10 [shape = 's32[1]{0}', space=sflag, size = 0x4, scoped, tag = 'scoped memory for tpu_custom_call.1']
    #allocation11 [shape = 'u8[8192]{0}', space=vmem, size = 0x2000, scoped, tag = 'input window, operand 5, single buffered']
    #allocation12 [shape = 'u8[512]{0}', space=vmem, size = 0x400, scoped, tag = 'input window, operand 6, single buffered']
    #allocation13 [shape = 's32[1]{0}', space=sflag, size = 0x4, scoped, tag = 'scoped memory for tpu_custom_call.1']
    #allocation14 [shape = 'u8[8192]{0}', space=vmem, size = 0x2000, scoped, tag = 'input window, operand 7, single buffered']
    #allocation15 [shape = 'u8[512]{0}', space=vmem, size = 0x400, scoped, tag = 'input window, operand 8, single buffered']
    #allocation16 [shape = 's32[1]{0}', space=sflag, size = 0x4, scoped, tag = 'scoped memory for tpu_custom_call.1']
    #allocation17 [shape = 'u8[4096]{0}', space=vmem, size = 0x1000, scoped, tag = 'output window, operand 0, single buffered']
    %16 = vsyncpa [#allocation4], 0
    %17 = vsyncpa [#allocation7], 0
    %18 = vsyncpa [#allocation10], 0
    %19 = vsyncpa [#allocation13], 0
    %20 = vsyncpa [#allocation16], 0
    %21 = vsyncpa [#allocation5], 0
    // Predicated region
    $region2: #{tpu_custom_call.1} parent=1 // pred_check
      _
    $region3: #{tpu_custom_call.1} parent=1 // pred_check_branch
      %23 = sbr.rel (0) target = $region5
    $region4: #{tpu_custom_call.1} parent=1 // pred_region
      _
    $region5: #{tpu_custom_call.1} parent=1 // pred_fallthru
      _
    // Predicated region
    $region6: #{tpu_custom_call.1} parent=1 // pred_check
      _
    $region7: #{tpu_custom_call.1} parent=1 // pred_check_branch
      %25 = sbr.rel (0) target = $region9
    $region8: #{tpu_custom_call.1} parent=1 // pred_region
      %s27 = ssub.s32 256, 256
      %28 = vsyncadd [#allocation4], %s27
      %s29 = sshll.u32 [#allocation3], 4
      %s30 = int_to_ptr.vmem [resolvable:$true] %s29
      %35 = dma.hbm_to_vmem [thread:$0]  %s1, 256, %s30, [#allocation4], 64, 64, 4
    $region9: #{tpu_custom_call.1} parent=1 // pred_fallthru
      _
    // Predicated region
    $region10: #{tpu_custom_call.1} parent=1 // pred_check
      _
    $region11: #{tpu_custom_call.1} parent=1 // pred_check_branch
      %37 = sbr.rel (0) target = $region13
    $region12: #{tpu_custom_call.1} parent=1 // pred_region
      %s39 = ssub.s32 256, 256
      %40 = vsyncadd [#allocation7], %s39
      %s41 = sshll.u32 [#allocation6], 4
      %s42 = int_to_ptr.vmem [resolvable:$true] %s41
      %47 = dma.hbm_to_vmem [thread:$0]  %s2, 256, %s42, [#allocation7], 64, 64, 4
    $region13: #{tpu_custom_call.1} parent=1 // pred_fallthru
      _
    // Predicated region
    $region14: #{tpu_custom_call.1} parent=1 // pred_check
      _
    $region15: #{tpu_custom_call.1} parent=1 // pred_check_branch
      %49 = sbr.rel (0) target = $region17
    $region16: #{tpu_custom_call.1} parent=1 // pred_region
      %s51 = ssub.s32 16, 16
      %52 = vsyncadd [#allocation7], %s51
      %s54 = sshll.u32 [#allocation8], 4
      %s55 = int_to_ptr.vmem [resolvable:$true] %s54
      %57 = dma.hbm_to_vmem [thread:$0]  %s3, 16, %s55, [#allocation7]
    $region17: #{tpu_custom_call.1} parent=1 // pred_fallthru
      _
    // Predicated region
    $region18: #{tpu_custom_call.1} parent=1 // pred_check
      _
    $region19: #{tpu_custom_call.1} parent=1 // pred_check_branch
      %59 = sbr.rel (0) target = $region21
    $region20: #{tpu_custom_call.1} parent=1 // pred_region
      %s61 = ssub.s32 256, 256
      %62 = vsyncadd [#allocation10], %s61
      %s63 = sshll.u32 [#allocation9], 4
      %s64 = int_to_ptr.vmem [resolvable:$true] %s63
      %69 = dma.hbm_to_vmem [thread:$0]  %s4, 256, %s64, [#allocation10], 64, 64, 4
    $region21: #{tpu_custom_call.1} parent=1 // pred_fallthru
      _
    // Predicated region
    $region22: #{tpu_custom_call.1} parent=1 // pred_check
      _
    $region23: #{tpu_custom_call.1} parent=1 // pred_check_branch
      %71 = sbr.rel (0) target = $region25
    $region24: #{tpu_custom_call.1} parent=1 // pred_region
      %s73 = ssub.s32 256, 256
      %74 = vsyncadd [#allocation10], %s73
      %s75 = sshll.u32 [#allocation11], 4
      %s76 = int_to_ptr.vmem [resolvable:$true] %s75
      %81 = dma.hbm_to_vmem [thread:$0]  %s5, 256, %s76, [#allocation10], 64, 64, 4
    $region25: #{tpu_custom_call.1} parent=1 // pred_fallthru
      _
    // Predicated region
    $region26: #{tpu_custom_call.1} parent=1 // pred_check
      _
    $region27: #{tpu_custom_call.1} parent=1 // pred_check_branch
      %83 = sbr.rel (0) target = $region29
    $region28: #{tpu_custom_call.1} parent=1 // pred_region
      %s85 = ssub.s32 16, 16
      %86 = vsyncadd [#allocation13], %s85
      %s88 = sshll.u32 [#allocation12], 4
      %s89 = int_to_ptr.vmem [resolvable:$true] %s88
      %91 = dma.hbm_to_vmem [thread:$0]  %s6, 16, %s89, [#allocation13]
    $region29: #{tpu_custom_call.1} parent=1 // pred_fallthru
      _
    // Predicated region
    $region30: #{tpu_custom_call.1} parent=1 // pred_check
      _
    $region31: #{tpu_custom_call.1} parent=1 // pred_check_branch
      %93 = sbr.rel (0) target = $region33
    $region32: #{tpu_custom_call.1} parent=1 // pred_region
      %s95 = ssub.s32 256, 256
      %96 = vsyncadd [#allocation13], %s95
      %s97 = sshll.u32 [#allocation14], 4
      %s98 = int_to_ptr.vmem [resolvable:$true] %s97
      %103 = dma.hbm_to_vmem [thread:$0]  %s7, 256, %s98, [#allocation13], 64, 64, 4
    $region33: #{tpu_custom_call.1} parent=1 // pred_fallthru
      _
    // Predicated region
    $region34: #{tpu_custom_call.1} parent=1 // pred_check
      _
    $region35: #{tpu_custom_call.1} parent=1 // pred_check_branch
      %105 = sbr.rel (0) target = $region37
    $region36: #{tpu_custom_call.1} parent=1 // pred_region
      %s107 = ssub.s32 16, 16
      %108 = vsyncadd [#allocation16], %s107
      %s110 = sshll.u32 [#allocation15], 4
      %s111 = int_to_ptr.vmem [resolvable:$true] %s110
      %113 = dma.hbm_to_vmem [thread:$0]  %s8, 16, %s111, [#allocation16]
    $region37: #{tpu_custom_call.1} parent=1 // pred_fallthru
      _
    // Predicated region
    $region38: #{tpu_custom_call.1} parent=1 // pred_check
      _
    $region39: #{tpu_custom_call.1} parent=1 // pred_check_branch
      %115 = sbr.rel (0) target = $region41
    $region40: #{tpu_custom_call.1} parent=1 // pred_region
      _
    $region41: #{tpu_custom_call.1} parent=1 // pred_fallthru
      _
    // Predicated region
    $region42: #{tpu_custom_call.1} parent=1 // pred_check
      _
    $region43: #{tpu_custom_call.1} parent=1 // pred_check_branch
      %117 = sbr.rel (0) target = $region45
    $region44: #{tpu_custom_call.1} parent=1 // pred_region
      _
    $region45: #{tpu_custom_call.1} parent=1 // pred_fallthru
      _
    // Predicated region
    $region46: #{tpu_custom_call.1} parent=1 // pred_check
      _
    $region47: #{tpu_custom_call.1} parent=1 // pred_check_branch
      %119 = sbr.rel (0) target = $region49
    $region48: #{tpu_custom_call.1} parent=1 // pred_region
      %120 = dma.done [#allocation4], 256
    $region49: #{tpu_custom_call.1} parent=1 // pred_fallthru
      _
    // Predicated region
    $region50: #{tpu_custom_call.1} parent=1 // pred_check
      _
    $region51: #{tpu_custom_call.1} parent=1 // pred_check_branch
      %122 = sbr.rel (0) target = $region53
    $region52: #{tpu_custom_call.1} parent=1 // pred_region
      %123 = dma.done [#allocation7], 256
    $region53: #{tpu_custom_call.1} parent=1 // pred_fallthru
      _
    // Predicated region
    $region54: #{tpu_custom_call.1} parent=1 // pred_check
      _
    $region55: #{tpu_custom_call.1} parent=1 // pred_check_branch
      %125 = sbr.rel (0) target = $region57
    $region56: #{tpu_custom_call.1} parent=1 // pred_region
      %126 = dma.done [#allocation7], 16
    $region57: #{tpu_custom_call.1} parent=1 // pred_fallthru
      _
    // Predicated region
    $region58: #{tpu_custom_call.1} parent=1 // pred_check
      _
    $region59: #{tpu_custom_call.1} parent=1 // pred_check_branch
      %128 = sbr.rel (0) target = $region61
    $region60: #{tpu_custom_call.1} parent=1 // pred_region
      %129 = dma.done [#allocation10], 256
    $region61: #{tpu_custom_call.1} parent=1 // pred_fallthru
      _
    // Predicated region
    $region62: #{tpu_custom_call.1} parent=1 // pred_check
      _
    $region63: #{tpu_custom_call.1} parent=1 // pred_check_branch
      %131 = sbr.rel (0) target = $region65
    $region64: #{tpu_custom_call.1} parent=1 // pred_region
      %132 = dma.done [#allocation10], 256
    $region65: #{tpu_custom_call.1} parent=1 // pred_fallthru
      _
    // Predicated region
    $region66: #{tpu_custom_call.1} parent=1 // pred_check
      _
    $region67: #{tpu_custom_call.1} parent=1 // pred_check_branch
      %134 = sbr.rel (0) target = $region69
    $region68: #{tpu_custom_call.1} parent=1 // pred_region
      %135 = dma.done [#allocation13], 16
    $region69: #{tpu_custom_call.1} parent=1 // pred_fallthru
      _
    // Predicated region
    $region70: #{tpu_custom_call.1} parent=1 // pred_check
      _
    $region71: #{tpu_custom_call.1} parent=1 // pred_check_branch
      %137 = sbr.rel (0) target = $region73
    $region72: #{tpu_custom_call.1} parent=1 // pred_region
      %138 = dma.done [#allocation13], 256
    $region73: #{tpu_custom_call.1} parent=1 // pred_fallthru
      _
    // Predicated region
    $region74: #{tpu_custom_call.1} parent=1 // pred_check
      _
    $region75: #{tpu_custom_call.1} parent=1 // pred_check_branch
      %140 = sbr.rel (0) target = $region77
    $region76: #{tpu_custom_call.1} parent=1 // pred_region
      %141 = dma.done [#allocation16], 16
    $region77: #{tpu_custom_call.1} parent=1 // pred_fallthru
      _
    %v143 = vld [vmem:[#allocation6] sm:$0xf]
    %v144 = vld [vmem:[#allocation6 + $0x4] sm:$0xf]
    %v145 = vld [vmem:[#allocation6 + $0x8] sm:$0xf]
    %v146 = vld [vmem:[#allocation6 + $0xc] sm:$0xf]
    %v147 = vld [vmem:[#allocation9] sm:$0xf]
    %v148 = vld [vmem:[#allocation9 + $0x4] sm:$0xf]
    %v149 = vld [vmem:[#allocation9 + $0x8] sm:$0xf]
    %v150 = vld [vmem:[#allocation9 + $0xc] sm:$0xf]
    %v151 = vld [vmem:[#allocation11] sm:$0xf]
    %v152 = vld [vmem:[#allocation11 + $0x4] sm:$0xf]
    %v153 = vld [vmem:[#allocation11 + $0x8] sm:$0xf]
    %v154 = vld [vmem:[#allocation11 + $0xc] sm:$0xf]
    %v155 = vld [vmem:[#allocation12] sm:$0x1]
    %v157 = vlaneseq
    %v158 = vshrl.u32 %v157, 7
    %v159 = vsub.s32 0, %v158
    %v160 = vrot.slane %v155, %v159
    %v162 = vld [vmem:[%s0] sm:$0xf]
    %v163 = vld [vmem:[%s0 + $0x4] sm:$0xf]
    %v164 = vld [vmem:[%s0 + $0x8] sm:$0xf]
    %v165 = vld [vmem:[%s0 + $0xc] sm:$0xf]
    %v166 = vld [vmem:[%s0 + $0x10] sm:$0xf]
    %v167 = vld [vmem:[%s0 + $0x14] sm:$0xf]
    %v168 = vld [vmem:[%s0 + $0x18] sm:$0xf]
    %v169 = vld [vmem:[%s0 + $0x1c] sm:$0xf]
    %v170 = vld [vmem:[#allocation3] sm:$0xf]
    %v171 = vld [vmem:[#allocation3 + $0x4] sm:$0xf]
    %v172 = vld [vmem:[#allocation3 + $0x8] sm:$0xf]
    %v173 = vld [vmem:[#allocation3 + $0xc] sm:$0xf]
    %v174 = vld [vmem:[#allocation8] sm:$0x1]
    %v176 = vlaneseq
    %v177 = vshrl.u32 %v176, 7
    %v178 = vsub.s32 0, %v177
    %v179 = vrot.slane %v174, %v178
    %v189 = vunpack.c.l.b16 %v162
    %v190 = vunpack.c.l.b16 %v163
    %v191 = vunpack.c.l.b16 %v164
    %v192 = vunpack.c.l.b16 %v165
    %v193 = vunpack.c.l.b16 %v166
    %v194 = vunpack.c.l.b16 %v167
    %v195 = vunpack.c.l.b16 %v168
    %v196 = vunpack.c.l.b16 %v169
    %v197 = vpack.c.b16 %v190, %v189
    %v198 = vpack.c.b16 %v192, %v191
    %v199 = vpack.c.b16 %v194, %v193
    %v200 = vpack.c.b16 %v196, %v195
    %v205 = vunpack.c.l.b16 %v170
    %v206 = vunpack.c.l.b16 %v171
    %v207 = vunpack.c.l.b16 %v172
    %v208 = vunpack.c.l.b16 %v173
    %v209 = vpack.c.b16 %v206, %v205
    %v210 = vpack.c.b16 %v208, %v207
    %vm213 = vcmask 261120
    %v215 = vsel %vm213, %v197, 0
    %v218 = vsel %vm213, %v198, 0
    %v221 = vsel %vm213, %v199, 0
    %v224 = vsel %vm213, %v200, 0
    %226 = vmatprep.subr.bf16.mxu0 0
    %227 = vmatpush1.bf16.msra.mxu0 0
    %228 = vmatprep.subr.bf16.mxu0 0
    %229 = vmatpush1.bf16.msra.mxu0 0
    %230 = vmatprep.subr.bf16.mxu0 0
    %231 = vmatpush1.bf16.msra.mxu0 0
    %232 = vmatprep.subr.bf16.mxu0 0
    %233 = vmatpush1.bf16.msra.mxu0 0
    %234 = vmatprep.subr.bf16.mxu0 0
    %235 = vmatpush1.bf16.msra.mxu0 0
    %236 = vmatprep.subr.bf16.mxu0 0
    %237 = vmatpush1.bf16.msra.mxu0 0
    %238 = vmatprep.subr.bf16.mxu0 0
    %239 = vmatpush1.bf16.msra.mxu0 %v210
    %240 = vmatprep.subr.bf16.mxu0 0
    %241 = vmatpush1.bf16.msra.mxu0 %v209
    %242 = vmatprep.subr.bf16.mxu0 0
    %243 = vmatpush2.bf16.msra.mxu0 0
    %244 = vmatprep.subr.bf16.mxu0 0
    %245 = vmatpush2.bf16.msra.mxu0 0
    %246 = vmatprep.subr.bf16.mxu0 0
    %247 = vmatpush2.bf16.msra.mxu0 0
    %248 = vmatprep.subr.bf16.mxu0 0
    %249 = vmatpush2.bf16.msra.mxu0 0
    %250 = vmatprep.subr.bf16.mxu0 0
    %251 = vmatpush2.bf16.msra.mxu0 0
    %252 = vmatprep.subr.bf16.mxu0 0
    %253 = vmatpush2.bf16.msra.mxu0 0
    %254 = vmatprep.subr.bf16.mxu0 0
    %255 = vmatpush2.bf16.msra.mxu0 0
    %256 = vmatprep.subr.bf16.mxu0 0
    %257 = vmatpush2.bf16.msra.mxu0 0
    %258 = vmatprep.mubr.bf16.mxu0 0
    %259 = vmatmul.mubr.bf16.gmra.mxu0 %v215
    %v260 = vpop.f32.mrf.mxu0
    %v261 = vadd.f32 %v179, %v260
    %v262 = vpop.f32.mrf.mxu0
    %v263 = vpop.f32.mrf.mxu0
    %v264 = vadd.f32 %v179, %v263
    %v265 = vpop.f32.mrf.mxu0
    %266 = vmatprep.mubr.bf16.mxu0 0
    %267 = vmatmul.mubr.bf16.gmra.mxu0 %v218
    %v268 = vpop.f32.mrf.mxu0
    %v269 = vadd.f32 %v179, %v268
    %v270 = vpop.f32.mrf.mxu0
    %v271 = vpop.f32.mrf.mxu0
    %v272 = vadd.f32 %v179, %v271
    %v273 = vpop.f32.mrf.mxu0
    %274 = vmatprep.mubr.bf16.mxu0 0
    %275 = vmatmul.mubr.bf16.gmra.mxu0 %v221
    %v276 = vpop.f32.mrf.mxu0
    %v277 = vadd.f32 %v179, %v276
    %v278 = vpop.f32.mrf.mxu0
    %v279 = vpop.f32.mrf.mxu0
    %v280 = vadd.f32 %v179, %v279
    %v281 = vpop.f32.mrf.mxu0
    %282 = vmatprep.mubr.bf16.mxu0 0
    %283 = vmatmul.mubr.bf16.gmra.mxu0 %v224
    %v284 = vpop.f32.mrf.mxu0
    %v285 = vadd.f32 %v179, %v284
    %v286 = vpop.f32.mrf.mxu0
    %v287 = vpop.f32.mrf.mxu0
    %v288 = vadd.f32 %v179, %v287
    %v289 = vpop.f32.mrf.mxu0
    %290 = vdwg.mxu0
    %291 = vst [vmem:[#allocation2] sm:$0xff] %v261
    %292 = vst [vmem:[#allocation2 + $0x8] sm:$0xff] %v264
    %293 = vst [vmem:[#allocation2 + $0x10] sm:$0xff] %v269
    %294 = vst [vmem:[#allocation2 + $0x18] sm:$0xff] %v272
    %295 = vst [vmem:[#allocation2 + $0x20] sm:$0xff] %v277
    %296 = vst [vmem:[#allocation2 + $0x28] sm:$0xff] %v280
    %297 = vst [vmem:[#allocation2 + $0x30] sm:$0xff] %v285
    %298 = vst [vmem:[#allocation2 + $0x38] sm:$0xff] %v288
    %v299 = vld [vmem:[#allocation2] sm:$0xff]
    %v304 = vunpack.c.l.b16 %v143
    %v305 = vunpack.c.l.b16 %v144
    %v306 = vunpack.c.l.b16 %v145
    %v307 = vunpack.c.l.b16 %v146
    %v308 = vpack.c.b16 %v305, %v304
    %v309 = vpack.c.b16 %v307, %v306
    %v313 = vsel %vm213, 0, 0
    %315 = vmatprep.subr.bf16.mxu0 0
    %316 = vmatpush1.bf16.msra.mxu0 0
    %317 = vmatprep.subr.bf16.mxu0 0
    %318 = vmatpush1.bf16.msra.mxu0 0
    %319 = vmatprep.subr.bf16.mxu0 0
    %320 = vmatpush1.bf16.msra.mxu0 0
    %321 = vmatprep.subr.bf16.mxu0 0
    %322 = vmatpush1.bf16.msra.mxu0 0
    %323 = vmatprep.subr.bf16.mxu0 0
    %324 = vmatpush1.bf16.msra.mxu0 0
    %325 = vmatprep.subr.bf16.mxu0 0
    %326 = vmatpush1.bf16.msra.mxu0 0
    %327 = vmatprep.subr.bf16.mxu0 0
    %328 = vmatpush1.bf16.msra.mxu0 %v309
    %329 = vmatprep.subr.bf16.mxu0 0
    %330 = vmatpush1.bf16.msra.mxu0 %v308
    %331 = vmatprep.subr.bf16.mxu0 0
    %332 = vmatpush2.bf16.msra.mxu0 0
    %333 = vmatprep.subr.bf16.mxu0 0
    %334 = vmatpush2.bf16.msra.mxu0 0
    %335 = vmatprep.subr.bf16.mxu0 0
    %336 = vmatpush2.bf16.msra.mxu0 0
    %337 = vmatprep.subr.bf16.mxu0 0
    %338 = vmatpush2.bf16.msra.mxu0 0
    %339 = vmatprep.subr.bf16.mxu0 0
    %340 = vmatpush2.bf16.msra.mxu0 0
    %341 = vmatprep.subr.bf16.mxu0 0
    %342 = vmatpush2.bf16.msra.mxu0 0
    %343 = vmatprep.subr.bf16.mxu0 0
    %344 = vmatpush2.bf16.msra.mxu0 0
    %345 = vmatprep.subr.bf16.mxu0 0
    %346 = vmatpush2.bf16.msra.mxu0 0
    %347 = vmatprep.mubr.bf16.mxu0 0
    %348 = vmatmul.mubr.bf16.gmra.mxu0 %v313
    %v349 = vpop.f32.mrf.mxu0
    %v350 = vadd.f32 0.0, %v349
    %v351 = vpop.f32.mrf.mxu0
    %v352 = vpop.f32.mrf.mxu0
    %v353 = vpop.f32.mrf.mxu0
    %354 = vdwg.mxu0
    %v355 = vadd.f32 %v299, %v350
    %v356 = vxor.u32 %v355, 2147483648
    %v357 = vmul.f32 %v356, 1.442695
    %v358 = vpow.pop %v357
    %v359 = vadd.f32 %v358, 1.0
    %v360 = vrcp.pop %v359
    %v361 = vmul.f32 1.0, %v360
    %v362 = vmul.f32 %v361, 2.0
    %v363 = vsub.f32 %v362, 1.0
    %v364 = vmul.f32 %v361, 0.0
    %366 = vrot.lane.b32.xlu0 %v363, 64
    %v367 = vpop.permute.xlu0 %366
    %v369 = vmul.f32 %v361, %v367
    %371 = vrot.lane.b32.xlu0 %v369, 32
    %v372 = vpop.permute.xlu0 %371
    %v374 = vadd.f32 %v364, %v372
    %v375 = vtanh.pop %v374
    %377 = vrot.lane.b32.xlu0 %v375, 64
    %v378 = vpop.permute.xlu0 %377
    %v380 = vmul.f32 %v361, %v378
    %v381 = vpack.c.bf16 %v380, %v380
    %v386 = vunpack.c.l.b16 %v151
    %v387 = vunpack.c.l.b16 %v152
    %v388 = vunpack.c.l.b16 %v153
    %v389 = vunpack.c.l.b16 %v154
    %v390 = vpack.c.b16 %v387, %v386
    %v391 = vpack.c.b16 %v389, %v388
    %394 = vmatprep.subr.bf16.mxu0 0
    %395 = vmatpush1.bf16.msra.mxu0 0
    %396 = vmatprep.subr.bf16.mxu0 0
    %397 = vmatpush1.bf16.msra.mxu0 0
    %398 = vmatprep.subr.bf16.mxu0 0
    %399 = vmatpush1.bf16.msra.mxu0 0
    %400 = vmatprep.subr.bf16.mxu0 0
    %401 = vmatpush1.bf16.msra.mxu0 0
    %402 = vmatprep.subr.bf16.mxu0 0
    %403 = vmatpush1.bf16.msra.mxu0 0
    %404 = vmatprep.subr.bf16.mxu0 0
    %405 = vmatpush1.bf16.msra.mxu0 0
    %406 = vmatprep.subr.bf16.mxu0 0
    %407 = vmatpush1.bf16.msra.mxu0 %v391
    %408 = vmatprep.subr.bf16.mxu0 0
    %409 = vmatpush1.bf16.msra.mxu0 %v390
    %410 = vmatprep.subr.bf16.mxu0 0
    %411 = vmatpush2.bf16.msra.mxu0 0
    %412 = vmatprep.subr.bf16.mxu0 0
    %413 = vmatpush2.bf16.msra.mxu0 0
    %414 = vmatprep.subr.bf16.mxu0 0
    %415 = vmatpush2.bf16.msra.mxu0 0
    %416 = vmatprep.subr.bf16.mxu0 0
    %417 = vmatpush2.bf16.msra.mxu0 0
    %418 = vmatprep.subr.bf16.mxu0 0
    %419 = vmatpush2.bf16.msra.mxu0 0
    %420 = vmatprep.subr.bf16.mxu0 0
    %421 = vmatpush2.bf16.msra.mxu0 0
    %422 = vmatprep.subr.bf16.mxu0 0
    %423 = vmatpush2.bf16.msra.mxu0 0
    %424 = vmatprep.subr.bf16.mxu0 0
    %425 = vmatpush2.bf16.msra.mxu0 0
    %426 = vmatprep.mubr.bf16.mxu0 0
    %427 = vmatmul.mubr.bf16.gmra.mxu0 %v313
    %v428 = vpop.f32.mrf.mxu0
    %v429 = vadd.f32 0.0, %v428
    %v430 = vpop.f32.mrf.mxu0
    %v431 = vpop.f32.mrf.mxu0
    %v432 = vpop.f32.mrf.mxu0
    %433 = vdwg.mxu0
    %435 = vrot.lane.b32.xlu0 %v381, 32
    %v436 = vpop.permute.xlu0 %435
    %v441 = vunpack.c.l.b16 %v147
    %v442 = vunpack.c.l.b16 %v148
    %v443 = vunpack.c.l.b16 %v149
    %v444 = vunpack.c.l.b16 %v150
    %v445 = vpack.c.b16 %v442, %v441
    %v446 = vpack.c.b16 %v444, %v443
    %v450 = vsel %vm213, %v436, 0
    %452 = vmatprep.subr.bf16.mxu0 0
    %453 = vmatpush1.bf16.msra.mxu0 0
    %454 = vmatprep.subr.bf16.mxu0 0
    %455 = vmatpush1.bf16.msra.mxu0 0
    %456 = vmatprep.subr.bf16.mxu0 0
    %457 = vmatpush1.bf16.msra.mxu0 0
    %458 = vmatprep.subr.bf16.mxu0 0
    %459 = vmatpush1.bf16.msra.mxu0 0
    %460 = vmatprep.subr.bf16.mxu0 0
    %461 = vmatpush1.bf16.msra.mxu0 0
    %462 = vmatprep.subr.bf16.mxu0 0
    %463 = vmatpush1.bf16.msra.mxu0 0
    %464 = vmatprep.subr.bf16.mxu0 0
    %465 = vmatpush1.bf16.msra.mxu0 %v446
    %466 = vmatprep.subr.bf16.mxu0 0
    %467 = vmatpush1.bf16.msra.mxu0 %v445
    %468 = vmatprep.subr.bf16.mxu0 0
    %469 = vmatpush2.bf16.msra.mxu0 0
    %470 = vmatprep.subr.bf16.mxu0 0
    %471 = vmatpush2.bf16.msra.mxu0 0
    %472 = vmatprep.subr.bf16.mxu0 0
    %473 = vmatpush2.bf16.msra.mxu0 0
    %474 = vmatprep.subr.bf16.mxu0 0
    %475 = vmatpush2.bf16.msra.mxu0 0
    %476 = vmatprep.subr.bf16.mxu0 0
    %477 = vmatpush2.bf16.msra.mxu0 0
    %478 = vmatprep.subr.bf16.mxu0 0
    %479 = vmatpush2.bf16.msra.mxu0 0
    %480 = vmatprep.subr.bf16.mxu0 0
    %481 = vmatpush2.bf16.msra.mxu0 0
    %482 = vmatprep.subr.bf16.mxu0 0
    %483 = vmatpush2.bf16.msra.mxu0 0
    %484 = vmatprep.mubr.bf16.mxu0 0
    %485 = vmatmul.mubr.bf16.gmra.mxu0 %v450
    %v486 = vpop.f32.mrf.mxu0
    %v487 = vadd.f32 %v429, %v486
    %v488 = vpop.f32.mrf.mxu0
    %v489 = vpop.f32.mrf.mxu0
    %v490 = vpop.f32.mrf.mxu0
    %491 = vdwg.mxu0
    %v492 = vadd.f32 %v487, %v160
    %v493 = vxor.u32 %v492, 2147483648
    %v494 = vmul.f32 %v493, 1.442695
    %v495 = vpow.pop %v494
    %v496 = vadd.f32 %v495, 1.0
    %v497 = vrcp.pop %v496
    %v498 = vmul.f32 1.0, %v497
    %v499 = vmul.f32 %v498, 2.0
    %v500 = vsub.f32 %v499, 1.0
    %v501 = vmul.f32 %v498, 0.0
    %503 = vrot.lane.b32.xlu0 %v500, 64
    %v504 = vpop.permute.xlu0 %503
    %v506 = vmul.f32 %v498, %v504
    %508 = vrot.lane.b32.xlu0 %v506, 32
    %v509 = vpop.permute.xlu0 %508
    %v511 = vadd.f32 %v501, %v509
    %v512 = vtanh.pop %v511
    %514 = vrot.lane.b32.xlu0 %v512, 64
    %v515 = vpop.permute.xlu0 %514
    %v517 = vmul.f32 %v498, %v515
    %s518 = scalar_lea.vmem [#allocation2], 8
    %v519 = vld [vmem:[%s518] sm:$0xff]
    %520 = vmatprep.subr.bf16.mxu0 0
    %521 = vmatpush1.bf16.msra.mxu0 0
    %522 = vmatprep.subr.bf16.mxu0 0
    %523 = vmatpush1.bf16.msra.mxu0 0
    %524 = vmatprep.subr.bf16.mxu0 0
    %525 = vmatpush1.bf16.msra.mxu0 0
    %526 = vmatprep.subr.bf16.mxu0 0
    %527 = vmatpush1.bf16.msra.mxu0 0
    %528 = vmatprep.subr.bf16.mxu0 0
    %529 = vmatpush1.bf16.msra.mxu0 0
    %530 = vmatprep.subr.bf16.mxu0 0
    %531 = vmatpush1.bf16.msra.mxu0 0
    %532 = vmatprep.subr.bf16.mxu0 0
    %533 = vmatpush1.bf16.msra.mxu0 %v309
    %534 = vmatprep.subr.bf16.mxu0 0
    %535 = vmatpush1.bf16.msra.mxu0 %v308
    %536 = vmatprep.subr.bf16.mxu0 0
    %537 = vmatpush2.bf16.msra.mxu0 0
    %538 = vmatprep.subr.bf16.mxu0 0
    %539 = vmatpush2.bf16.msra.mxu0 0
    %540 = vmatprep.subr.bf16.mxu0 0
    %541 = vmatpush2.bf16.msra.mxu0 0
    %542 = vmatprep.subr.bf16.mxu0 0
    %543 = vmatpush2.bf16.msra.mxu0 0
    %544 = vmatprep.subr.bf16.mxu0 0
    %545 = vmatpush2.bf16.msra.mxu0 0
    %546 = vmatprep.subr.bf16.mxu0 0
    %547 = vmatpush2.bf16.msra.mxu0 0
    %548 = vmatprep.subr.bf16.mxu0 0
    %549 = vmatpush2.bf16.msra.mxu0 0
    %550 = vmatprep.subr.bf16.mxu0 0
    %551 = vmatpush2.bf16.msra.mxu0 0
    %552 = vmatprep.mubr.bf16.mxu0 0
    %553 = vmatmul.mubr.bf16.gmra.mxu0 %v450
    %v554 = vpop.f32.mrf.mxu0
    %v555 = vadd.f32 0.0, %v554
    %v556 = vpop.f32.mrf.mxu0
    %v557 = vpop.f32.mrf.mxu0
    %v558 = vpop.f32.mrf.mxu0
    %559 = vdwg.mxu0
    %v560 = vadd.f32 %v519, %v555
    %v561 = vxor.u32 %v560, 2147483648
    %v562 = vmul.f32 %v561, 1.442695
    %v563 = vpow.pop %v562
    %v564 = vadd.f32 %v563, 1.0
    %v565 = vrcp.pop %v564
    %v566 = vmul.f32 1.0, %v565
    %v567 = vmul.f32 %v566, 2.0
    %v568 = vsub.f32 %v567, 1.0
    %v569 = vmul.f32 %v566, %v374
    %571 = vrot.lane.b32.xlu0 %v568, 64
    %v572 = vpop.permute.xlu0 %571
    %v574 = vmul.f32 %v566, %v572
    %576 = vrot.lane.b32.xlu0 %v574, 32
    %v577 = vpop.permute.xlu0 %576
    %v579 = vadd.f32 %v569, %v577
    %v580 = vtanh.pop %v579
    %582 = vrot.lane.b32.xlu0 %v580, 64
    %v583 = vpop.permute.xlu0 %582
    %v585 = vmul.f32 %v566, %v583
    %v586 = vpack.c.bf16 %v585, %v585
    %v587 = vpack.c.bf16 %v517, %v517
    %589 = vrot.lane.b32.xlu0 %v587, 32
    %v590 = vpop.permute.xlu0 %589
    %v592 = vsel %vm213, %v590, 0
    %594 = vmatprep.subr.bf16.mxu0 0
    %595 = vmatpush1.bf16.msra.mxu0 0
    %596 = vmatprep.subr.bf16.mxu0 0
    %597 = vmatpush1.bf16.msra.mxu0 0
    %598 = vmatprep.subr.bf16.mxu0 0
    %599 = vmatpush1.bf16.msra.mxu0 0
    %600 = vmatprep.subr.bf16.mxu0 0
    %601 = vmatpush1.bf16.msra.mxu0 0
    %602 = vmatprep.subr.bf16.mxu0 0
    %603 = vmatpush1.bf16.msra.mxu0 0
    %604 = vmatprep.subr.bf16.mxu0 0
    %605 = vmatpush1.bf16.msra.mxu0 0
    %606 = vmatprep.subr.bf16.mxu0 0
    %607 = vmatpush1.bf16.msra.mxu0 %v391
    %608 = vmatprep.subr.bf16.mxu0 0
    %609 = vmatpush1.bf16.msra.mxu0 %v390
    %610 = vmatprep.subr.bf16.mxu0 0
    %611 = vmatpush2.bf16.msra.mxu0 0
    %612 = vmatprep.subr.bf16.mxu0 0
    %613 = vmatpush2.bf16.msra.mxu0 0
    %614 = vmatprep.subr.bf16.mxu0 0
    %615 = vmatpush2.bf16.msra.mxu0 0
    %616 = vmatprep.subr.bf16.mxu0 0
    %617 = vmatpush2.bf16.msra.mxu0 0
    %618 = vmatprep.subr.bf16.mxu0 0
    %619 = vmatpush2.bf16.msra.mxu0 0
    %620 = vmatprep.subr.bf16.mxu0 0
    %621 = vmatpush2.bf16.msra.mxu0 0
    %622 = vmatprep.subr.bf16.mxu0 0
    %623 = vmatpush2.bf16.msra.mxu0 0
    %624 = vmatprep.subr.bf16.mxu0 0
    %625 = vmatpush2.bf16.msra.mxu0 0
    %626 = vmatprep.mubr.bf16.mxu0 0
    %627 = vmatmul.mubr.bf16.gmra.mxu0 %v592
    %v628 = vpop.f32.mrf.mxu0
    %v629 = vadd.f32 0.0, %v628
    %v630 = vpop.f32.mrf.mxu0
    %v631 = vpop.f32.mrf.mxu0
    %v632 = vpop.f32.mrf.mxu0
    %633 = vdwg.mxu0
    %635 = vrot.lane.b32.xlu0 %v586, 32
    %v636 = vpop.permute.xlu0 %635
    %v638 = vsel %vm213, %v636, 0
    %640 = vmatprep.subr.bf16.mxu0 0
    %641 = vmatpush1.bf16.msra.mxu0 0
    %642 = vmatprep.subr.bf16.mxu0 0
    %643 = vmatpush1.bf16.msra.mxu0 0
    %644 = vmatprep.subr.bf16.mxu0 0
    %645 = vmatpush1.bf16.msra.mxu0 0
    %646 = vmatprep.subr.bf16.mxu0 0
    %647 = vmatpush1.bf16.msra.mxu0 0
    %648 = vmatprep.subr.bf16.mxu0 0
    %649 = vmatpush1.bf16.msra.mxu0 0
    %650 = vmatprep.subr.bf16.mxu0 0
    %651 = vmatpush1.bf16.msra.mxu0 0
    %652 = vmatprep.subr.bf16.mxu0 0
    %653 = vmatpush1.bf16.msra.mxu0 %v446
    %654 = vmatprep.subr.bf16.mxu0 0
    %655 = vmatpush1.bf16.msra.mxu0 %v445
    %656 = vmatprep.subr.bf16.mxu0 0
    %657 = vmatpush2.bf16.msra.mxu0 0
    %658 = vmatprep.subr.bf16.mxu0 0
    %659 = vmatpush2.bf16.msra.mxu0 0
    %660 = vmatprep.subr.bf16.mxu0 0
    %661 = vmatpush2.bf16.msra.mxu0 0
    %662 = vmatprep.subr.bf16.mxu0 0
    %663 = vmatpush2.bf16.msra.mxu0 0
    %664 = vmatprep.subr.bf16.mxu0 0
    %665 = vmatpush2.bf16.msra.mxu0 0
    %666 = vmatprep.subr.bf16.mxu0 0
    %667 = vmatpush2.bf16.msra.mxu0 0
    %668 = vmatprep.subr.bf16.mxu0 0
    %669 = vmatpush2.bf16.msra.mxu0 0
    %670 = vmatprep.subr.bf16.mxu0 0
    %671 = vmatpush2.bf16.msra.mxu0 0
    %672 = vmatprep.mubr.bf16.mxu0 0
    %673 = vmatmul.mubr.bf16.gmra.mxu0 %v638
    %v674 = vpop.f32.mrf.mxu0
    %v675 = vadd.f32 %v629, %v674
    %v676 = vpop.f32.mrf.mxu0
    %v677 = vpop.f32.mrf.mxu0
    %v678 = vpop.f32.mrf.mxu0
    %679 = vdwg.mxu0
    %v680 = vadd.f32 %v675, %v160
    %v681 = vxor.u32 %v680, 2147483648
    %v682 = vmul.f32 %v681, 1.442695
    %v683 = vpow.pop %v682
    %v684 = vadd.f32 %v683, 1.0
    %v685 = vrcp.pop %v684
    %v686 = vmul.f32 1.0, %v685
    %v687 = vmul.f32 %v686, 2.0
    %v688 = vsub.f32 %v687, 1.0
    %v689 = vmul.f32 %v686, %v511
    %691 = vrot.lane.b32.xlu0 %v688, 64
    %v692 = vpop.permute.xlu0 %691
    %v694 = vmul.f32 %v686, %v692
    %696 = vrot.lane.b32.xlu0 %v694, 32
    %v697 = vpop.permute.xlu0 %696
    %v699 = vadd.f32 %v689, %v697
    %v700 = vtanh.pop %v699
    %702 = vrot.lane.b32.xlu0 %v700, 64
    %v703 = vpop.permute.xlu0 %702
    %v705 = vmul.f32 %v686, %v703
    %s706 = scalar_lea.vmem [#allocation2], 16
    %v707 = vld [vmem:[%s706] sm:$0xff]
    %708 = vmatprep.subr.bf16.mxu0 0
    %709 = vmatpush1.bf16.msra.mxu0 0
    %710 = vmatprep.subr.bf16.mxu0 0
    %711 = vmatpush1.bf16.msra.mxu0 0
    %712 = vmatprep.subr.bf16.mxu0 0
    %713 = vmatpush1.bf16.msra.mxu0 0
    %714 = vmatprep.subr.bf16.mxu0 0
    %715 = vmatpush1.bf16.msra.mxu0 0
    %716 = vmatprep.subr.bf16.mxu0 0
    %717 = vmatpush1.bf16.msra.mxu0 0
    %718 = vmatprep.subr.bf16.mxu0 0
    %719 = vmatpush1.bf16.msra.mxu0 0
    %720 = vmatprep.subr.bf16.mxu0 0
    %721 = vmatpush1.bf16.msra.mxu0 %v309
    %722 = vmatprep.subr.bf16.mxu0 0
    %723 = vmatpush1.bf16.msra.mxu0 %v308
    %724 = vmatprep.subr.bf16.mxu0 0
    %725 = vmatpush2.bf16.msra.mxu0 0
    %726 = vmatprep.subr.bf16.mxu0 0
    %727 = vmatpush2.bf16.msra.mxu0 0
    %728 = vmatprep.subr.bf16.mxu0 0
    %729 = vmatpush2.bf16.msra.mxu0 0
    %730 = vmatprep.subr.bf16.mxu0 0
    %731 = vmatpush2.bf16.msra.mxu0 0
    %732 = vmatprep.subr.bf16.mxu0 0
    %733 = vmatpush2.bf16.msra.mxu0 0
    %734 = vmatprep.subr.bf16.mxu0 0
    %735 = vmatpush2.bf16.msra.mxu0 0
    %736 = vmatprep.subr.bf16.mxu0 0
    %737 = vmatpush2.bf16.msra.mxu0 0
    %738 = vmatprep.subr.bf16.mxu0 0
    %739 = vmatpush2.bf16.msra.mxu0 0
    %740 = vmatprep.mubr.bf16.mxu0 0
    %741 = vmatmul.mubr.bf16.gmra.mxu0 %v638
    %v742 = vpop.f32.mrf.mxu0
    %v743 = vadd.f32 0.0, %v742
    %v744 = vpop.f32.mrf.mxu0
    %v745 = vpop.f32.mrf.mxu0
    %v746 = vpop.f32.mrf.mxu0
    %747 = vdwg.mxu0
    %v748 = vadd.f32 %v707, %v743
    %v749 = vxor.u32 %v748, 2147483648
    %v750 = vmul.f32 %v749, 1.442695
    %v751 = vpow.pop %v750
    %v752 = vadd.f32 %v751, 1.0
    %v753 = vrcp.pop %v752
    %v754 = vmul.f32 1.0, %v753
    %v755 = vmul.f32 %v754, 2.0
    %v756 = vsub.f32 %v755, 1.0
    %v757 = vmul.f32 %v754, %v579
    %759 = vrot.lane.b32.xlu0 %v756, 64
    %v760 = vpop.permute.xlu0 %759
    %v762 = vmul.f32 %v754, %v760
    %764 = vrot.lane.b32.xlu0 %v762, 32
    %v765 = vpop.permute.xlu0 %764
    %v767 = vadd.f32 %v757, %v765
    %v768 = vtanh.pop %v767
    %770 = vrot.lane.b32.xlu0 %v768, 64
    %v771 = vpop.permute.xlu0 %770
    %v773 = vmul.f32 %v754, %v771
    %v774 = vpack.c.bf16 %v773, %v773
    %v775 = vpack.c.bf16 %v705, %v705
    %777 = vrot.lane.b32.xlu0 %v775, 32
    %v778 = vpop.permute.xlu0 %777
    %v780 = vsel %vm213, %v778, 0
    %782 = vmatprep.subr.bf16.mxu0 0
    %783 = vmatpush1.bf16.msra.mxu0 0
    %784 = vmatprep.subr.bf16.mxu0 0
    %785 = vmatpush1.bf16.msra.mxu0 0
    %786 = vmatprep.subr.bf16.mxu0 0
    %787 = vmatpush1.bf16.msra.mxu0 0
    %788 = vmatprep.subr.bf16.mxu0 0
    %789 = vmatpush1.bf16.msra.mxu0 0
    %790 = vmatprep.subr.bf16.mxu0 0
    %791 = vmatpush1.bf16.msra.mxu0 0
    %792 = vmatprep.subr.bf16.mxu0 0
    %793 = vmatpush1.bf16.msra.mxu0 0
    %794 = vmatprep.subr.bf16.mxu0 0
    %795 = vmatpush1.bf16.msra.mxu0 %v391
    %796 = vmatprep.subr.bf16.mxu0 0
    %797 = vmatpush1.bf16.msra.mxu0 %v390
    %798 = vmatprep.subr.bf16.mxu0 0
    %799 = vmatpush2.bf16.msra.mxu0 0
    %800 = vmatprep.subr.bf16.mxu0 0
    %801 = vmatpush2.bf16.msra.mxu0 0
    %802 = vmatprep.subr.bf16.mxu0 0
    %803 = vmatpush2.bf16.msra.mxu0 0
    %804 = vmatprep.subr.bf16.mxu0 0
    %805 = vmatpush2.bf16.msra.mxu0 0
    %806 = vmatprep.subr.bf16.mxu0 0
    %807 = vmatpush2.bf16.msra.mxu0 0
    %808 = vmatprep.subr.bf16.mxu0 0
    %809 = vmatpush2.bf16.msra.mxu0 0
    %810 = vmatprep.subr.bf16.mxu0 0
    %811 = vmatpush2.bf16.msra.mxu0 0
    %812 = vmatprep.subr.bf16.mxu0 0
    %813 = vmatpush2.bf16.msra.mxu0 0
    %814 = vmatprep.mubr.bf16.mxu0 0
    %815 = vmatmul.mubr.bf16.gmra.mxu0 %v780
    %v816 = vpop.f32.mrf.mxu0
    %v817 = vadd.f32 0.0, %v816
    %v818 = vpop.f32.mrf.mxu0
    %v819 = vpop.f32.mrf.mxu0
    %v820 = vpop.f32.mrf.mxu0
    %821 = vdwg.mxu0
    %823 = vrot.lane.b32.xlu0 %v774, 32
    %v824 = vpop.permute.xlu0 %823
    %v826 = vsel %vm213, %v824, 0
    %828 = vmatprep.subr.bf16.mxu0 0
    %829 = vmatpush1.bf16.msra.mxu0 0
    %830 = vmatprep.subr.bf16.mxu0 0
    %831 = vmatpush1.bf16.msra.mxu0 0
    %832 = vmatprep.subr.bf16.mxu0 0
    %833 = vmatpush1.bf16.msra.mxu0 0
    %834 = vmatprep.subr.bf16.mxu0 0
    %835 = vmatpush1.bf16.msra.mxu0 0
    %836 = vmatprep.subr.bf16.mxu0 0
    %837 = vmatpush1.bf16.msra.mxu0 0
    %838 = vmatprep.subr.bf16.mxu0 0
    %839 = vmatpush1.bf16.msra.mxu0 0
    %840 = vmatprep.subr.bf16.mxu0 0
    %841 = vmatpush1.bf16.msra.mxu0 %v446
    %842 = vmatprep.subr.bf16.mxu0 0
    %843 = vmatpush1.bf16.msra.mxu0 %v445
    %844 = vmatprep.subr.bf16.mxu0 0
    %845 = vmatpush2.bf16.msra.mxu0 0
    %846 = vmatprep.subr.bf16.mxu0 0
    %847 = vmatpush2.bf16.msra.mxu0 0
    %848 = vmatprep.subr.bf16.mxu0 0
    %849 = vmatpush2.bf16.msra.mxu0 0
    %850 = vmatprep.subr.bf16.mxu0 0
    %851 = vmatpush2.bf16.msra.mxu0 0
    %852 = vmatprep.subr.bf16.mxu0 0
    %853 = vmatpush2.bf16.msra.mxu0 0
    %854 = vmatprep.subr.bf16.mxu0 0
    %855 = vmatpush2.bf16.msra.mxu0 0
    %856 = vmatprep.subr.bf16.mxu0 0
    %857 = vmatpush2.bf16.msra.mxu0 0
    %858 = vmatprep.subr.bf16.mxu0 0
    %859 = vmatpush2.bf16.msra.mxu0 0
    %860 = vmatprep.mubr.bf16.mxu0 0
    %861 = vmatmul.mubr.bf16.gmra.mxu0 %v826
    %v862 = vpop.f32.mrf.mxu0
    %v863 = vadd.f32 %v817, %v862
    %v864 = vpop.f32.mrf.mxu0
    %v865 = vpop.f32.mrf.mxu0
    %v866 = vpop.f32.mrf.mxu0
    %867 = vdwg.mxu0
    %v868 = vadd.f32 %v863, %v160
    %v869 = vxor.u32 %v868, 2147483648
    %v870 = vmul.f32 %v869, 1.442695
    %v871 = vpow.pop %v870
    %v872 = vadd.f32 %v871, 1.0
    %v873 = vrcp.pop %v872
    %v874 = vmul.f32 1.0, %v873
    %v875 = vmul.f32 %v874, 2.0
    %v876 = vsub.f32 %v875, 1.0
    %v877 = vmul.f32 %v874, %v699
    %879 = vrot.lane.b32.xlu0 %v876, 64
    %v880 = vpop.permute.xlu0 %879
    %v882 = vmul.f32 %v874, %v880
    %884 = vrot.lane.b32.xlu0 %v882, 32
    %v885 = vpop.permute.xlu0 %884
    %v887 = vadd.f32 %v877, %v885
    %v888 = vtanh.pop %v887
    %890 = vrot.lane.b32.xlu0 %v888, 64
    %v891 = vpop.permute.xlu0 %890
    %v893 = vmul.f32 %v874, %v891
    %s894 = scalar_lea.vmem [#allocation2], 24
    %v895 = vld [vmem:[%s894] sm:$0xff]
    %896 = vmatprep.subr.bf16.mxu0 0
    %897 = vmatpush1.bf16.msra.mxu0 0
    %898 = vmatprep.subr.bf16.mxu0 0
    %899 = vmatpush1.bf16.msra.mxu0 0
    %900 = vmatprep.subr.bf16.mxu0 0
    %901 = vmatpush1.bf16.msra.mxu0 0
    %902 = vmatprep.subr.bf16.mxu0 0
    %903 = vmatpush1.bf16.msra.mxu0 0
    %904 = vmatprep.subr.bf16.mxu0 0
    %905 = vmatpush1.bf16.msra.mxu0 0
    %906 = vmatprep.subr.bf16.mxu0 0
    %907 = vmatpush1.bf16.msra.mxu0 0
    %908 = vmatprep.subr.bf16.mxu0 0
    %909 = vmatpush1.bf16.msra.mxu0 %v309
    %910 = vmatprep.subr.bf16.mxu0 0
    %911 = vmatpush1.bf16.msra.mxu0 %v308
    %912 = vmatprep.subr.bf16.mxu0 0
    %913 = vmatpush2.bf16.msra.mxu0 0
    %914 = vmatprep.subr.bf16.mxu0 0
    %915 = vmatpush2.bf16.msra.mxu0 0
    %916 = vmatprep.subr.bf16.mxu0 0
    %917 = vmatpush2.bf16.msra.mxu0 0
    %918 = vmatprep.subr.bf16.mxu0 0
    %919 = vmatpush2.bf16.msra.mxu0 0
    %920 = vmatprep.subr.bf16.mxu0 0
    %921 = vmatpush2.bf16.msra.mxu0 0
    %922 = vmatprep.subr.bf16.mxu0 0
    %923 = vmatpush2.bf16.msra.mxu0 0
    %924 = vmatprep.subr.bf16.mxu0 0
    %925 = vmatpush2.bf16.msra.mxu0 0
    %926 = vmatprep.subr.bf16.mxu0 0
    %927 = vmatpush2.bf16.msra.mxu0 0
    %928 = vmatprep.mubr.bf16.mxu0 0
    %929 = vmatmul.mubr.bf16.gmra.mxu0 %v826
    %v930 = vpop.f32.mrf.mxu0
    %v931 = vadd.f32 0.0, %v930
    %v932 = vpop.f32.mrf.mxu0
    %v933 = vpop.f32.mrf.mxu0
    %v934 = vpop.f32.mrf.mxu0
    %935 = vdwg.mxu0
    %v936 = vadd.f32 %v895, %v931
    %v937 = vxor.u32 %v936, 2147483648
    %v938 = vmul.f32 %v937, 1.442695
    %v939 = vpow.pop %v938
    %v940 = vadd.f32 %v939, 1.0
    %v941 = vrcp.pop %v940
    %v942 = vmul.f32 1.0, %v941
    %v943 = vmul.f32 %v942, 2.0
    %v944 = vsub.f32 %v943, 1.0
    %v945 = vmul.f32 %v942, %v767
    %947 = vrot.lane.b32.xlu0 %v944, 64
    %v948 = vpop.permute.xlu0 %947
    %v950 = vmul.f32 %v942, %v948
    %952 = vrot.lane.b32.xlu0 %v950, 32
    %v953 = vpop.permute.xlu0 %952
    %v955 = vadd.f32 %v945, %v953
    %v956 = vtanh.pop %v955
    %958 = vrot.lane.b32.xlu0 %v956, 64
    %v959 = vpop.permute.xlu0 %958
    %v961 = vmul.f32 %v942, %v959
    %v962 = vpack.c.bf16 %v961, %v961
    %v963 = vpack.c.bf16 %v893, %v893
    %965 = vrot.lane.b32.xlu0 %v963, 32
    %v966 = vpop.permute.xlu0 %965
    %v968 = vsel %vm213, %v966, 0
    %970 = vmatprep.subr.bf16.mxu0 0
    %971 = vmatpush1.bf16.msra.mxu0 0
    %972 = vmatprep.subr.bf16.mxu0 0
    %973 = vmatpush1.bf16.msra.mxu0 0
    %974 = vmatprep.subr.bf16.mxu0 0
    %975 = vmatpush1.bf16.msra.mxu0 0
    %976 = vmatprep.subr.bf16.mxu0 0
    %977 = vmatpush1.bf16.msra.mxu0 0
    %978 = vmatprep.subr.bf16.mxu0 0
    %979 = vmatpush1.bf16.msra.mxu0 0
    %980 = vmatprep.subr.bf16.mxu0 0
    %981 = vmatpush1.bf16.msra.mxu0 0
    %982 = vmatprep.subr.bf16.mxu0 0
    %983 = vmatpush1.bf16.msra.mxu0 %v391
    %984 = vmatprep.subr.bf16.mxu0 0
    %985 = vmatpush1.bf16.msra.mxu0 %v390
    %986 = vmatprep.subr.bf16.mxu0 0
    %987 = vmatpush2.bf16.msra.mxu0 0
    %988 = vmatprep.subr.bf16.mxu0 0
    %989 = vmatpush2.bf16.msra.mxu0 0
    %990 = vmatprep.subr.bf16.mxu0 0
    %991 = vmatpush2.bf16.msra.mxu0 0
    %992 = vmatprep.subr.bf16.mxu0 0
    %993 = vmatpush2.bf16.msra.mxu0 0
    %994 = vmatprep.subr.bf16.mxu0 0
    %995 = vmatpush2.bf16.msra.mxu0 0
    %996 = vmatprep.subr.bf16.mxu0 0
    %997 = vmatpush2.bf16.msra.mxu0 0
    %998 = vmatprep.subr.bf16.mxu0 0
    %999 = vmatpush2.bf16.msra.mxu0 0
    %1000 = vmatprep.subr.bf16.mxu0 0
    %1001 = vmatpush2.bf16.msra.mxu0 0
    %1002 = vmatprep.mubr.bf16.mxu0 0
    %1003 = vmatmul.mubr.bf16.gmra.mxu0 %v968
    %v1004 = vpop.f32.mrf.mxu0
    %v1005 = vadd.f32 0.0, %v1004
    %v1006 = vpop.f32.mrf.mxu0
    %v1007 = vpop.f32.mrf.mxu0
    %v1008 = vpop.f32.mrf.mxu0
    %1009 = vdwg.mxu0
    %1011 = vrot.lane.b32.xlu0 %v962, 32
    %v1012 = vpop.permute.xlu0 %1011
    %v1014 = vsel %vm213, %v1012, 0
    %1016 = vmatprep.subr.bf16.mxu0 0
    %1017 = vmatpush1.bf16.msra.mxu0 0
    %1018 = vmatprep.subr.bf16.mxu0 0
    %1019 = vmatpush1.bf16.msra.mxu0 0
    %1020 = vmatprep.subr.bf16.mxu0 0
    %1021 = vmatpush1.bf16.msra.mxu0 0
    %1022 = vmatprep.subr.bf16.mxu0 0
    %1023 = vmatpush1.bf16.msra.mxu0 0
    %1024 = vmatprep.subr.bf16.mxu0 0
    %1025 = vmatpush1.bf16.msra.mxu0 0
    %1026 = vmatprep.subr.bf16.mxu0 0
    %1027 = vmatpush1.bf16.msra.mxu0 0
    %1028 = vmatprep.subr.bf16.mxu0 0
    %1029 = vmatpush1.bf16.msra.mxu0 %v446
    %1030 = vmatprep.subr.bf16.mxu0 0
    %1031 = vmatpush1.bf16.msra.mxu0 %v445
    %1032 = vmatprep.subr.bf16.mxu0 0
    %1033 = vmatpush2.bf16.msra.mxu0 0
    %1034 = vmatprep.subr.bf16.mxu0 0
    %1035 = vmatpush2.bf16.msra.mxu0 0
    %1036 = vmatprep.subr.bf16.mxu0 0
    %1037 = vmatpush2.bf16.msra.mxu0 0
    %1038 = vmatprep.subr.bf16.mxu0 0
    %1039 = vmatpush2.bf16.msra.mxu0 0
    %1040 = vmatprep.subr.bf16.mxu0 0
    %1041 = vmatpush2.bf16.msra.mxu0 0
    %1042 = vmatprep.subr.bf16.mxu0 0
    %1043 = vmatpush2.bf16.msra.mxu0 0
    %1044 = vmatprep.subr.bf16.mxu0 0
    %1045 = vmatpush2.bf16.msra.mxu0 0
    %1046 = vmatprep.subr.bf16.mxu0 0
    %1047 = vmatpush2.bf16.msra.mxu0 0
    %1048 = vmatprep.mubr.bf16.mxu0 0
    %1049 = vmatmul.mubr.bf16.gmra.mxu0 %v1014
    %v1050 = vpop.f32.mrf.mxu0
    %v1051 = vadd.f32 %v1005, %v1050
    %v1052 = vpop.f32.mrf.mxu0
    %v1053 = vpop.f32.mrf.mxu0
    %v1054 = vpop.f32.mrf.mxu0
    %1055 = vdwg.mxu0
    %v1056 = vadd.f32 %v1051, %v160
    %v1057 = vxor.u32 %v1056, 2147483648
    %v1058 = vmul.f32 %v1057, 1.442695
    %v1059 = vpow.pop %v1058
    %v1060 = vadd.f32 %v1059, 1.0
    %v1061 = vrcp.pop %v1060
    %v1062 = vmul.f32 1.0, %v1061
    %v1063 = vmul.f32 %v1062, 2.0
    %v1064 = vsub.f32 %v1063, 1.0
    %v1065 = vmul.f32 %v1062, %v887
    %1067 = vrot.lane.b32.xlu0 %v1064, 64
    %v1068 = vpop.permute.xlu0 %1067
    %v1070 = vmul.f32 %v1062, %v1068
    %1072 = vrot.lane.b32.xlu0 %v1070, 32
    %v1073 = vpop.permute.xlu0 %1072
    %v1075 = vadd.f32 %v1065, %v1073
    %v1076 = vtanh.pop %v1075
    %1078 = vrot.lane.b32.xlu0 %v1076, 64
    %v1079 = vpop.permute.xlu0 %1078
    %v1081 = vmul.f32 %v1062, %v1079
    %s1082 = scalar_lea.vmem [#allocation2], 32
    %v1083 = vld [vmem:[%s1082] sm:$0xff]
    %1084 = vmatprep.subr.bf16.mxu0 0
    %1085 = vmatpush1.bf16.msra.mxu0 0
    %1086 = vmatprep.subr.bf16.mxu0 0
    %1087 = vmatpush1.bf16.msra.mxu0 0
    %1088 = vmatprep.subr.bf16.mxu0 0
    %1089 = vmatpush1.bf16.msra.mxu0 0
    %1090 = vmatprep.subr.bf16.mxu0 0
    %1091 = vmatpush1.bf16.msra.mxu0 0
    %1092 = vmatprep.subr.bf16.mxu0 0
    %1093 = vmatpush1.bf16.msra.mxu0 0
    %1094 = vmatprep.subr.bf16.mxu0 0
    %1095 = vmatpush1.bf16.msra.mxu0 0
    %1096 = vmatprep.subr.bf16.mxu0 0
    %1097 = vmatpush1.bf16.msra.mxu0 %v309
    %1098 = vmatprep.subr.bf16.mxu0 0
    %1099 = vmatpush1.bf16.msra.mxu0 %v308
    %1100 = vmatprep.subr.bf16.mxu0 0
    %1101 = vmatpush2.bf16.msra.mxu0 0
    %1102 = vmatprep.subr.bf16.mxu0 0
    %1103 = vmatpush2.bf16.msra.mxu0 0
    %1104 = vmatprep.subr.bf16.mxu0 0
    %1105 = vmatpush2.bf16.msra.mxu0 0
    %1106 = vmatprep.subr.bf16.mxu0 0
    %1107 = vmatpush2.bf16.msra.mxu0 0
    %1108 = vmatprep.subr.bf16.mxu0 0
    %1109 = vmatpush2.bf16.msra.mxu0 0
    %1110 = vmatprep.subr.bf16.mxu0 0
    %1111 = vmatpush2.bf16.msra.mxu0 0
    %1112 = vmatprep.subr.bf16.mxu0 0
    %1113 = vmatpush2.bf16.msra.mxu0 0
    %1114 = vmatprep.subr.bf16.mxu0 0
    %1115 = vmatpush2.bf16.msra.mxu0 0
    %1116 = vmatprep.mubr.bf16.mxu0 0
    %1117 = vmatmul.mubr.bf16.gmra.mxu0 %v1014
    %v1118 = vpop.f32.mrf.mxu0
    %v1119 = vadd.f32 0.0, %v1118
    %v1120 = vpop.f32.mrf.mxu0
    %v1121 = vpop.f32.mrf.mxu0
    %v1122 = vpop.f32.mrf.mxu0
    %1123 = vdwg.mxu0
    %v1124 = vadd.f32 %v1083, %v1119
    %v1125 = vxor.u32 %v1124, 2147483648
    %v1126 = vmul.f32 %v1125, 1.442695
    %v1127 = vpow.pop %v1126
    %v1128 = vadd.f32 %v1127, 1.0
    %v1129 = vrcp.pop %v1128
    %v1130 = vmul.f32 1.0, %v1129
    %v1131 = vmul.f32 %v1130, 2.0
    %v1132 = vsub.f32 %v1131, 1.0
    %v1133 = vmul.f32 %v1130, %v955
    %1135 = vrot.lane.b32.xlu0 %v1132, 64
    %v1136 = vpop.permute.xlu0 %1135
    %v1138 = vmul.f32 %v1130, %v1136
    %1140 = vrot.lane.b32.xlu0 %v1138, 32
    %v1141 = vpop.permute.xlu0 %1140
    %v1143 = vadd.f32 %v1133, %v1141
    %v1144 = vtanh.pop %v1143
    %1146 = vrot.lane.b32.xlu0 %v1144, 64
    %v1147 = vpop.permute.xlu0 %1146
    %v1149 = vmul.f32 %v1130, %v1147
    %v1150 = vpack.c.bf16 %v1149, %v1149
    %v1151 = vpack.c.bf16 %v1081, %v1081
    %1153 = vrot.lane.b32.xlu0 %v1151, 32
    %v1154 = vpop.permute.xlu0 %1153
    %v1156 = vsel %vm213, %v1154, 0
    %1158 = vmatprep.subr.bf16.mxu0 0
    %1159 = vmatpush1.bf16.msra.mxu0 0
    %1160 = vmatprep.subr.bf16.mxu0 0
    %1161 = vmatpush1.bf16.msra.mxu0 0
    %1162 = vmatprep.subr.bf16.mxu0 0
    %1163 = vmatpush1.bf16.msra.mxu0 0
    %1164 = vmatprep.subr.bf16.mxu0 0
    %1165 = vmatpush1.bf16.msra.mxu0 0
    %1166 = vmatprep.subr.bf16.mxu0 0
    %1167 = vmatpush1.bf16.msra.mxu0 0
    %1168 = vmatprep.subr.bf16.mxu0 0
    %1169 = vmatpush1.bf16.msra.mxu0 0
    %1170 = vmatprep.subr.bf16.mxu0 0
    %1171 = vmatpush1.bf16.msra.mxu0 %v391
    %1172 = vmatprep.subr.bf16.mxu0 0
    %1173 = vmatpush1.bf16.msra.mxu0 %v390
    %1174 = vmatprep.subr.bf16.mxu0 0
    %1175 = vmatpush2.bf16.msra.mxu0 0
    %1176 = vmatprep.subr.bf16.mxu0 0
    %1177 = vmatpush2.bf16.msra.mxu0 0
    %1178 = vmatprep.subr.bf16.mxu0 0
    %1179 = vmatpush2.bf16.msra.mxu0 0
    %1180 = vmatprep.subr.bf16.mxu0 0
    %1181 = vmatpush2.bf16.msra.mxu0 0
    %1182 = vmatprep.subr.bf16.mxu0 0
    %1183 = vmatpush2.bf16.msra.mxu0 0
    %1184 = vmatprep.subr.bf16.mxu0 0
    %1185 = vmatpush2.bf16.msra.mxu0 0
    %1186 = vmatprep.subr.bf16.mxu0 0
    %1187 = vmatpush2.bf16.msra.mxu0 0
    %1188 = vmatprep.subr.bf16.mxu0 0
    %1189 = vmatpush2.bf16.msra.mxu0 0
    %1190 = vmatprep.mubr.bf16.mxu0 0
    %1191 = vmatmul.mubr.bf16.gmra.mxu0 %v1156
    %v1192 = vpop.f32.mrf.mxu0
    %v1193 = vadd.f32 0.0, %v1192
    %v1194 = vpop.f32.mrf.mxu0
    %v1195 = vpop.f32.mrf.mxu0
    %v1196 = vpop.f32.mrf.mxu0
    %1197 = vdwg.mxu0
    %1199 = vrot.lane.b32.xlu0 %v1150, 32
    %v1200 = vpop.permute.xlu0 %1199
    %v1202 = vsel %vm213, %v1200, 0
    %1204 = vmatprep.subr.bf16.mxu0 0
    %1205 = vmatpush1.bf16.msra.mxu0 0
    %1206 = vmatprep.subr.bf16.mxu0 0
    %1207 = vmatpush1.bf16.msra.mxu0 0
    %1208 = vmatprep.subr.bf16.mxu0 0
    %1209 = vmatpush1.bf16.msra.mxu0 0
    %1210 = vmatprep.subr.bf16.mxu0 0
    %1211 = vmatpush1.bf16.msra.mxu0 0
    %1212 = vmatprep.subr.bf16.mxu0 0
    %1213 = vmatpush1.bf16.msra.mxu0 0
    %1214 = vmatprep.subr.bf16.mxu0 0
    %1215 = vmatpush1.bf16.msra.mxu0 0
    %1216 = vmatprep.subr.bf16.mxu0 0
    %1217 = vmatpush1.bf16.msra.mxu0 %v446
    %1218 = vmatprep.subr.bf16.mxu0 0
    %1219 = vmatpush1.bf16.msra.mxu0 %v445
    %1220 = vmatprep.subr.bf16.mxu0 0
    %1221 = vmatpush2.bf16.msra.mxu0 0
    %1222 = vmatprep.subr.bf16.mxu0 0
    %1223 = vmatpush2.bf16.msra.mxu0 0
    %1224 = vmatprep.subr.bf16.mxu0 0
    %1225 = vmatpush2.bf16.msra.mxu0 0
    %1226 = vmatprep.subr.bf16.mxu0 0
    %1227 = vmatpush2.bf16.msra.mxu0 0
    %1228 = vmatprep.subr.bf16.mxu0 0
    %1229 = vmatpush2.bf16.msra.mxu0 0
    %1230 = vmatprep.subr.bf16.mxu0 0
    %1231 = vmatpush2.bf16.msra.mxu0 0
    %1232 = vmatprep.subr.bf16.mxu0 0
    %1233 = vmatpush2.bf16.msra.mxu0 0
    %1234 = vmatprep.subr.bf16.mxu0 0
    %1235 = vmatpush2.bf16.msra.mxu0 0
    %1236 = vmatprep.mubr.bf16.mxu0 0
    %1237 = vmatmul.mubr.bf16.gmra.mxu0 %v1202
    %v1238 = vpop.f32.mrf.mxu0
    %v1239 = vadd.f32 %v1193, %v1238
    %v1240 = vpop.f32.mrf.mxu0
    %v1241 = vpop.f32.mrf.mxu0
    %v1242 = vpop.f32.mrf.mxu0
    %1243 = vdwg.mxu0
    %v1244 = vadd.f32 %v1239, %v160
    %v1245 = vxor.u32 %v1244, 2147483648
    %v1246 = vmul.f32 %v1245, 1.442695
    %v1247 = vpow.pop %v1246
    %v1248 = vadd.f32 %v1247, 1.0
    %v1249 = vrcp.pop %v1248
    %v1250 = vmul.f32 1.0, %v1249
    %v1251 = vmul.f32 %v1250, 2.0
    %v1252 = vsub.f32 %v1251, 1.0
    %v1253 = vmul.f32 %v1250, %v1075
    %1255 = vrot.lane.b32.xlu0 %v1252, 64
    %v1256 = vpop.permute.xlu0 %1255
    %v1258 = vmul.f32 %v1250, %v1256
    %1260 = vrot.lane.b32.xlu0 %v1258, 32
    %v1261 = vpop.permute.xlu0 %1260
    %v1263 = vadd.f32 %v1253, %v1261
    %v1264 = vtanh.pop %v1263
    %1266 = vrot.lane.b32.xlu0 %v1264, 64
    %v1267 = vpop.permute.xlu0 %1266
    %v1269 = vmul.f32 %v1250, %v1267
    %s1270 = scalar_lea.vmem [#allocation2], 40
    %v1271 = vld [vmem:[%s1270] sm:$0xff]
    %1272 = vmatprep.subr.bf16.mxu0 0
    %1273 = vmatpush1.bf16.msra.mxu0 0
    %1274 = vmatprep.subr.bf16.mxu0 0
    %1275 = vmatpush1.bf16.msra.mxu0 0
    %1276 = vmatprep.subr.bf16.mxu0 0
    %1277 = vmatpush1.bf16.msra.mxu0 0
    %1278 = vmatprep.subr.bf16.mxu0 0
    %1279 = vmatpush1.bf16.msra.mxu0 0
    %1280 = vmatprep.subr.bf16.mxu0 0
    %1281 = vmatpush1.bf16.msra.mxu0 0
    %1282 = vmatprep.subr.bf16.mxu0 0
    %1283 = vmatpush1.bf16.msra.mxu0 0
    %1284 = vmatprep.subr.bf16.mxu0 0
    %1285 = vmatpush1.bf16.msra.mxu0 %v309
    %1286 = vmatprep.subr.bf16.mxu0 0
    %1287 = vmatpush1.bf16.msra.mxu0 %v308
    %1288 = vmatprep.subr.bf16.mxu0 0
    %1289 = vmatpush2.bf16.msra.mxu0 0
    %1290 = vmatprep.subr.bf16.mxu0 0
    %1291 = vmatpush2.bf16.msra.mxu0 0
    %1292 = vmatprep.subr.bf16.mxu0 0
    %1293 = vmatpush2.bf16.msra.mxu0 0
    %1294 = vmatprep.subr.bf16.mxu0 0
    %1295 = vmatpush2.bf16.msra.mxu0 0
    %1296 = vmatprep.subr.bf16.mxu0 0
    %1297 = vmatpush2.bf16.msra.mxu0 0
    %1298 = vmatprep.subr.bf16.mxu0 0
    %1299 = vmatpush2.bf16.msra.mxu0 0
    %1300 = vmatprep.subr.bf16.mxu0 0
    %1301 = vmatpush2.bf16.msra.mxu0 0
    %1302 = vmatprep.subr.bf16.mxu0 0
    %1303 = vmatpush2.bf16.msra.mxu0 0
    %1304 = vmatprep.mubr.bf16.mxu0 0
    %1305 = vmatmul.mubr.bf16.gmra.mxu0 %v1202
    %v1306 = vpop.f32.mrf.mxu0
    %v1307 = vadd.f32 0.0, %v1306
    %v1308 = vpop.f32.mrf.mxu0
    %v1309 = vpop.f32.mrf.mxu0
    %v1310 = vpop.f32.mrf.mxu0
    %1311 = vdwg.mxu0
    %v1312 = vadd.f32 %v1271, %v1307
    %v1313 = vxor.u32 %v1312, 2147483648
    %v1314 = vmul.f32 %v1313, 1.442695
    %v1315 = vpow.pop %v1314
    %v1316 = vadd.f32 %v1315, 1.0
    %v1317 = vrcp.pop %v1316
    %v1318 = vmul.f32 1.0, %v1317
    %v1319 = vmul.f32 %v1318, 2.0
    %v1320 = vsub.f32 %v1319, 1.0
    %v1321 = vmul.f32 %v1318, %v1143
    %1323 = vrot.lane.b32.xlu0 %v1320, 64
    %v1324 = vpop.permute.xlu0 %1323
    %v1326 = vmul.f32 %v1318, %v1324
    %1328 = vrot.lane.b32.xlu0 %v1326, 32
    %v1329 = vpop.permute.xlu0 %1328
    %v1331 = vadd.f32 %v1321, %v1329
    %v1332 = vtanh.pop %v1331
    %1334 = vrot.lane.b32.xlu0 %v1332, 64
    %v1335 = vpop.permute.xlu0 %1334
    %v1337 = vmul.f32 %v1318, %v1335
    %v1338 = vpack.c.bf16 %v1337, %v1337
    %v1339 = vpack.c.bf16 %v1269, %v1269
    %1341 = vrot.lane.b32.xlu0 %v1339, 32
    %v1342 = vpop.permute.xlu0 %1341
    %v1344 = vsel %vm213, %v1342, 0
    %1346 = vmatprep.subr.bf16.mxu0 0
    %1347 = vmatpush1.bf16.msra.mxu0 0
    %1348 = vmatprep.subr.bf16.mxu0 0
    %1349 = vmatpush1.bf16.msra.mxu0 0
    %1350 = vmatprep.subr.bf16.mxu0 0
    %1351 = vmatpush1.bf16.msra.mxu0 0
    %1352 = vmatprep.subr.bf16.mxu0 0
    %1353 = vmatpush1.bf16.msra.mxu0 0
    %1354 = vmatprep.subr.bf16.mxu0 0
    %1355 = vmatpush1.bf16.msra.mxu0 0
    %1356 = vmatprep.subr.bf16.mxu0 0
    %1357 = vmatpush1.bf16.msra.mxu0 0
    %1358 = vmatprep.subr.bf16.mxu0 0
    %1359 = vmatpush1.bf16.msra.mxu0 %v391
    %1360 = vmatprep.subr.bf16.mxu0 0
    %1361 = vmatpush1.bf16.msra.mxu0 %v390
    %1362 = vmatprep.subr.bf16.mxu0 0
    %1363 = vmatpush2.bf16.msra.mxu0 0
    %1364 = vmatprep.subr.bf16.mxu0 0
    %1365 = vmatpush2.bf16.msra.mxu0 0
    %1366 = vmatprep.subr.bf16.mxu0 0
    %1367 = vmatpush2.bf16.msra.mxu0 0
    %1368 = vmatprep.subr.bf16.mxu0 0
    %1369 = vmatpush2.bf16.msra.mxu0 0
    %1370 = vmatprep.subr.bf16.mxu0 0
    %1371 = vmatpush2.bf16.msra.mxu0 0
    %1372 = vmatprep.subr.bf16.mxu0 0
    %1373 = vmatpush2.bf16.msra.mxu0 0
    %1374 = vmatprep.subr.bf16.mxu0 0
    %1375 = vmatpush2.bf16.msra.mxu0 0
    %1376 = vmatprep.subr.bf16.mxu0 0
    %1377 = vmatpush2.bf16.msra.mxu0 0
    %1378 = vmatprep.mubr.bf16.mxu0 0
    %1379 = vmatmul.mubr.bf16.gmra.mxu0 %v1344
    %v1380 = vpop.f32.mrf.mxu0
    %v1381 = vadd.f32 0.0, %v1380
    %v1382 = vpop.f32.mrf.mxu0
    %v1383 = vpop.f32.mrf.mxu0
    %v1384 = vpop.f32.mrf.mxu0
    %1385 = vdwg.mxu0
    %1387 = vrot.lane.b32.xlu0 %v1338, 32
    %v1388 = vpop.permute.xlu0 %1387
    %v1390 = vsel %vm213, %v1388, 0
    %1392 = vmatprep.subr.bf16.mxu0 0
    %1393 = vmatpush1.bf16.msra.mxu0 0
    %1394 = vmatprep.subr.bf16.mxu0 0
    %1395 = vmatpush1.bf16.msra.mxu0 0
    %1396 = vmatprep.subr.bf16.mxu0 0
    %1397 = vmatpush1.bf16.msra.mxu0 0
    %1398 = vmatprep.subr.bf16.mxu0 0
    %1399 = vmatpush1.bf16.msra.mxu0 0
    %1400 = vmatprep.subr.bf16.mxu0 0
    %1401 = vmatpush1.bf16.msra.mxu0 0
    %1402 = vmatprep.subr.bf16.mxu0 0
    %1403 = vmatpush1.bf16.msra.mxu0 0
    %1404 = vmatprep.subr.bf16.mxu0 0
    %1405 = vmatpush1.bf16.msra.mxu0 %v446
    %1406 = vmatprep.subr.bf16.mxu0 0
    %1407 = vmatpush1.bf16.msra.mxu0 %v445
    %1408 = vmatprep.subr.bf16.mxu0 0
    %1409 = vmatpush2.bf16.msra.mxu0 0
    %1410 = vmatprep.subr.bf16.mxu0 0
    %1411 = vmatpush2.bf16.msra.mxu0 0
    %1412 = vmatprep.subr.bf16.mxu0 0
    %1413 = vmatpush2.bf16.msra.mxu0 0
    %1414 = vmatprep.subr.bf16.mxu0 0
    %1415 = vmatpush2.bf16.msra.mxu0 0
    %1416 = vmatprep.subr.bf16.mxu0 0
    %1417 = vmatpush2.bf16.msra.mxu0 0
    %1418 = vmatprep.subr.bf16.mxu0 0
    %1419 = vmatpush2.bf16.msra.mxu0 0
    %1420 = vmatprep.subr.bf16.mxu0 0
    %1421 = vmatpush2.bf16.msra.mxu0 0
    %1422 = vmatprep.subr.bf16.mxu0 0
    %1423 = vmatpush2.bf16.msra.mxu0 0
    %1424 = vmatprep.mubr.bf16.mxu0 0
    %1425 = vmatmul.mubr.bf16.gmra.mxu0 %v1390
    %v1426 = vpop.f32.mrf.mxu0
    %v1427 = vadd.f32 %v1381, %v1426
    %v1428 = vpop.f32.mrf.mxu0
    %v1429 = vpop.f32.mrf.mxu0
    %v1430 = vpop.f32.mrf.mxu0
    %1431 = vdwg.mxu0
    %v1432 = vadd.f32 %v1427, %v160
    %v1433 = vxor.u32 %v1432, 2147483648
    %v1434 = vmul.f32 %v1433, 1.442695
    %v1435 = vpow.pop %v1434
    %v1436 = vadd.f32 %v1435, 1.0
    %v1437 = vrcp.pop %v1436
    %v1438 = vmul.f32 1.0, %v1437
    %v1439 = vmul.f32 %v1438, 2.0
    %v1440 = vsub.f32 %v1439, 1.0
    %v1441 = vmul.f32 %v1438, %v1263
    %1443 = vrot.lane.b32.xlu0 %v1440, 64
    %v1444 = vpop.permute.xlu0 %1443
    %v1446 = vmul.f32 %v1438, %v1444
    %1448 = vrot.lane.b32.xlu0 %v1446, 32
    %v1449 = vpop.permute.xlu0 %1448
    %v1451 = vadd.f32 %v1441, %v1449
    %v1452 = vtanh.pop %v1451
    %1454 = vrot.lane.b32.xlu0 %v1452, 64
    %v1455 = vpop.permute.xlu0 %1454
    %v1457 = vmul.f32 %v1438, %v1455
    %s1458 = scalar_lea.vmem [#allocation2], 48
    %v1459 = vld [vmem:[%s1458] sm:$0xff]
    %1460 = vmatprep.subr.bf16.mxu0 0
    %1461 = vmatpush1.bf16.msra.mxu0 0
    %1462 = vmatprep.subr.bf16.mxu0 0
    %1463 = vmatpush1.bf16.msra.mxu0 0
    %1464 = vmatprep.subr.bf16.mxu0 0
    %1465 = vmatpush1.bf16.msra.mxu0 0
    %1466 = vmatprep.subr.bf16.mxu0 0
    %1467 = vmatpush1.bf16.msra.mxu0 0
    %1468 = vmatprep.subr.bf16.mxu0 0
    %1469 = vmatpush1.bf16.msra.mxu0 0
    %1470 = vmatprep.subr.bf16.mxu0 0
    %1471 = vmatpush1.bf16.msra.mxu0 0
    %1472 = vmatprep.subr.bf16.mxu0 0
    %1473 = vmatpush1.bf16.msra.mxu0 %v309
    %1474 = vmatprep.subr.bf16.mxu0 0
    %1475 = vmatpush1.bf16.msra.mxu0 %v308
    %1476 = vmatprep.subr.bf16.mxu0 0
    %1477 = vmatpush2.bf16.msra.mxu0 0
    %1478 = vmatprep.subr.bf16.mxu0 0
    %1479 = vmatpush2.bf16.msra.mxu0 0
    %1480 = vmatprep.subr.bf16.mxu0 0
    %1481 = vmatpush2.bf16.msra.mxu0 0
    %1482 = vmatprep.subr.bf16.mxu0 0
    %1483 = vmatpush2.bf16.msra.mxu0 0
    %1484 = vmatprep.subr.bf16.mxu0 0
    %1485 = vmatpush2.bf16.msra.mxu0 0
    %1486 = vmatprep.subr.bf16.mxu0 0
    %1487 = vmatpush2.bf16.msra.mxu0 0
    %1488 = vmatprep.subr.bf16.mxu0 0
    %1489 = vmatpush2.bf16.msra.mxu0 0
    %1490 = vmatprep.subr.bf16.mxu0 0
    %1491 = vmatpush2.bf16.msra.mxu0 0
    %1492 = vmatprep.mubr.bf16.mxu0 0
    %1493 = vmatmul.mubr.bf16.gmra.mxu0 %v1390
    %v1494 = vpop.f32.mrf.mxu0
    %v1495 = vadd.f32 0.0, %v1494
    %v1496 = vpop.f32.mrf.mxu0
    %v1497 = vpop.f32.mrf.mxu0
    %v1498 = vpop.f32.mrf.mxu0
    %1499 = vdwg.mxu0
    %v1500 = vadd.f32 %v1459, %v1495
    %v1501 = vxor.u32 %v1500, 2147483648
    %v1502 = vmul.f32 %v1501, 1.442695
    %v1503 = vpow.pop %v1502
    %v1504 = vadd.f32 %v1503, 1.0
    %v1505 = vrcp.pop %v1504
    %v1506 = vmul.f32 1.0, %v1505
    %v1507 = vmul.f32 %v1506, 2.0
    %v1508 = vsub.f32 %v1507, 1.0
    %v1509 = vmul.f32 %v1506, %v1331
    %1511 = vrot.lane.b32.xlu0 %v1508, 64
    %v1512 = vpop.permute.xlu0 %1511
    %v1514 = vmul.f32 %v1506, %v1512
    %1516 = vrot.lane.b32.xlu0 %v1514, 32
    %v1517 = vpop.permute.xlu0 %1516
    %v1519 = vadd.f32 %v1509, %v1517
    %v1520 = vtanh.pop %v1519
    %1522 = vrot.lane.b32.xlu0 %v1520, 64
    %v1523 = vpop.permute.xlu0 %1522
    %v1525 = vmul.f32 %v1506, %v1523
    %v1526 = vpack.c.bf16 %v1525, %v1525
    %v1527 = vpack.c.bf16 %v1457, %v1457
    %1529 = vrot.lane.b32.xlu0 %v1527, 32
    %v1530 = vpop.permute.xlu0 %1529
    %v1532 = vsel %vm213, %v1530, 0
    %1534 = vmatprep.subr.bf16.mxu0 0
    %1535 = vmatpush1.bf16.msra.mxu0 0
    %1536 = vmatprep.subr.bf16.mxu0 0
    %1537 = vmatpush1.bf16.msra.mxu0 0
    %1538 = vmatprep.subr.bf16.mxu0 0
    %1539 = vmatpush1.bf16.msra.mxu0 0
    %1540 = vmatprep.subr.bf16.mxu0 0
    %1541 = vmatpush1.bf16.msra.mxu0 0
    %1542 = vmatprep.subr.bf16.mxu0 0
    %1543 = vmatpush1.bf16.msra.mxu0 0
    %1544 = vmatprep.subr.bf16.mxu0 0
    %1545 = vmatpush1.bf16.msra.mxu0 0
    %1546 = vmatprep.subr.bf16.mxu0 0
    %1547 = vmatpush1.bf16.msra.mxu0 %v391
    %1548 = vmatprep.subr.bf16.mxu0 0
    %1549 = vmatpush1.bf16.msra.mxu0 %v390
    %1550 = vmatprep.subr.bf16.mxu0 0
    %1551 = vmatpush2.bf16.msra.mxu0 0
    %1552 = vmatprep.subr.bf16.mxu0 0
    %1553 = vmatpush2.bf16.msra.mxu0 0
    %1554 = vmatprep.subr.bf16.mxu0 0
    %1555 = vmatpush2.bf16.msra.mxu0 0
    %1556 = vmatprep.subr.bf16.mxu0 0
    %1557 = vmatpush2.bf16.msra.mxu0 0
    %1558 = vmatprep.subr.bf16.mxu0 0
    %1559 = vmatpush2.bf16.msra.mxu0 0
    %1560 = vmatprep.subr.bf16.mxu0 0
    %1561 = vmatpush2.bf16.msra.mxu0 0
    %1562 = vmatprep.subr.bf16.mxu0 0
    %1563 = vmatpush2.bf16.msra.mxu0 0
    %1564 = vmatprep.subr.bf16.mxu0 0
    %1565 = vmatpush2.bf16.msra.mxu0 0
    %1566 = vmatprep.mubr.bf16.mxu0 0
    %1567 = vmatmul.mubr.bf16.gmra.mxu0 %v1532
    %v1568 = vpop.f32.mrf.mxu0
    %v1569 = vadd.f32 0.0, %v1568
    %v1570 = vpop.f32.mrf.mxu0
    %v1571 = vpop.f32.mrf.mxu0
    %v1572 = vpop.f32.mrf.mxu0
    %1573 = vdwg.mxu0
    %1575 = vrot.lane.b32.xlu0 %v1526, 32
    %v1576 = vpop.permute.xlu0 %1575
    %v1578 = vsel %vm213, %v1576, 0
    %1580 = vmatprep.subr.bf16.mxu0 0
    %1581 = vmatpush1.bf16.msra.mxu0 0
    %1582 = vmatprep.subr.bf16.mxu0 0
    %1583 = vmatpush1.bf16.msra.mxu0 0
    %1584 = vmatprep.subr.bf16.mxu0 0
    %1585 = vmatpush1.bf16.msra.mxu0 0
    %1586 = vmatprep.subr.bf16.mxu0 0
    %1587 = vmatpush1.bf16.msra.mxu0 0
    %1588 = vmatprep.subr.bf16.mxu0 0
    %1589 = vmatpush1.bf16.msra.mxu0 0
    %1590 = vmatprep.subr.bf16.mxu0 0
    %1591 = vmatpush1.bf16.msra.mxu0 0
    %1592 = vmatprep.subr.bf16.mxu0 0
    %1593 = vmatpush1.bf16.msra.mxu0 %v446
    %1594 = vmatprep.subr.bf16.mxu0 0
    %1595 = vmatpush1.bf16.msra.mxu0 %v445
    %1596 = vmatprep.subr.bf16.mxu0 0
    %1597 = vmatpush2.bf16.msra.mxu0 0
    %1598 = vmatprep.subr.bf16.mxu0 0
    %1599 = vmatpush2.bf16.msra.mxu0 0
    %1600 = vmatprep.subr.bf16.mxu0 0
    %1601 = vmatpush2.bf16.msra.mxu0 0
    %1602 = vmatprep.subr.bf16.mxu0 0
    %1603 = vmatpush2.bf16.msra.mxu0 0
    %1604 = vmatprep.subr.bf16.mxu0 0
    %1605 = vmatpush2.bf16.msra.mxu0 0
    %1606 = vmatprep.subr.bf16.mxu0 0
    %1607 = vmatpush2.bf16.msra.mxu0 0
    %1608 = vmatprep.subr.bf16.mxu0 0
    %1609 = vmatpush2.bf16.msra.mxu0 0
    %1610 = vmatprep.subr.bf16.mxu0 0
    %1611 = vmatpush2.bf16.msra.mxu0 0
    %1612 = vmatprep.mubr.bf16.mxu0 0
    %1613 = vmatmul.mubr.bf16.gmra.mxu0 %v1578
    %v1614 = vpop.f32.mrf.mxu0
    %v1615 = vadd.f32 %v1569, %v1614
    %v1616 = vpop.f32.mrf.mxu0
    %v1617 = vpop.f32.mrf.mxu0
    %v1618 = vpop.f32.mrf.mxu0
    %1619 = vdwg.mxu0
    %v1620 = vadd.f32 %v1615, %v160
    %v1621 = vxor.u32 %v1620, 2147483648
    %v1622 = vmul.f32 %v1621, 1.442695
    %v1623 = vpow.pop %v1622
    %v1624 = vadd.f32 %v1623, 1.0
    %v1625 = vrcp.pop %v1624
    %v1626 = vmul.f32 1.0, %v1625
    %v1627 = vmul.f32 %v1626, 2.0
    %v1628 = vsub.f32 %v1627, 1.0
    %v1629 = vmul.f32 %v1626, %v1451
    %1631 = vrot.lane.b32.xlu0 %v1628, 64
    %v1632 = vpop.permute.xlu0 %1631
    %v1634 = vmul.f32 %v1626, %v1632
    %1636 = vrot.lane.b32.xlu0 %v1634, 32
    %v1637 = vpop.permute.xlu0 %1636
    %v1639 = vadd.f32 %v1629, %v1637
    %v1640 = vtanh.pop %v1639
    %1642 = vrot.lane.b32.xlu0 %v1640, 64
    %v1643 = vpop.permute.xlu0 %1642
    %v1645 = vmul.f32 %v1626, %v1643
    %s1646 = scalar_lea.vmem [#allocation2], 56
    %v1647 = vld [vmem:[%s1646] sm:$0xff]
    %1648 = vmatprep.subr.bf16.mxu0 0
    %1649 = vmatpush1.bf16.msra.mxu0 0
    %1650 = vmatprep.subr.bf16.mxu0 0
    %1651 = vmatpush1.bf16.msra.mxu0 0
    %1652 = vmatprep.subr.bf16.mxu0 0
    %1653 = vmatpush1.bf16.msra.mxu0 0
    %1654 = vmatprep.subr.bf16.mxu0 0
    %1655 = vmatpush1.bf16.msra.mxu0 0
    %1656 = vmatprep.subr.bf16.mxu0 0
    %1657 = vmatpush1.bf16.msra.mxu0 0
    %1658 = vmatprep.subr.bf16.mxu0 0
    %1659 = vmatpush1.bf16.msra.mxu0 0
    %1660 = vmatprep.subr.bf16.mxu0 0
    %1661 = vmatpush1.bf16.msra.mxu0 %v309
    %1662 = vmatprep.subr.bf16.mxu0 0
    %1663 = vmatpush1.bf16.msra.mxu0 %v308
    %1664 = vmatprep.subr.bf16.mxu0 0
    %1665 = vmatpush2.bf16.msra.mxu0 0
    %1666 = vmatprep.subr.bf16.mxu0 0
    %1667 = vmatpush2.bf16.msra.mxu0 0
    %1668 = vmatprep.subr.bf16.mxu0 0
    %1669 = vmatpush2.bf16.msra.mxu0 0
    %1670 = vmatprep.subr.bf16.mxu0 0
    %1671 = vmatpush2.bf16.msra.mxu0 0
    %1672 = vmatprep.subr.bf16.mxu0 0
    %1673 = vmatpush2.bf16.msra.mxu0 0
    %1674 = vmatprep.subr.bf16.mxu0 0
    %1675 = vmatpush2.bf16.msra.mxu0 0
    %1676 = vmatprep.subr.bf16.mxu0 0
    %1677 = vmatpush2.bf16.msra.mxu0 0
    %1678 = vmatprep.subr.bf16.mxu0 0
    %1679 = vmatpush2.bf16.msra.mxu0 0
    %1680 = vmatprep.mubr.bf16.mxu0 0
    %1681 = vmatmul.mubr.bf16.gmra.mxu0 %v1578
    %v1682 = vpop.f32.mrf.mxu0
    %v1683 = vadd.f32 0.0, %v1682
    %v1684 = vpop.f32.mrf.mxu0
    %v1685 = vpop.f32.mrf.mxu0
    %v1686 = vpop.f32.mrf.mxu0
    %1687 = vdwg.mxu0
    %v1688 = vadd.f32 %v1647, %v1683
    %v1689 = vxor.u32 %v1688, 2147483648
    %v1690 = vmul.f32 %v1689, 1.442695
    %v1691 = vpow.pop %v1690
    %v1692 = vadd.f32 %v1691, 1.0
    %v1693 = vrcp.pop %v1692
    %v1694 = vmul.f32 1.0, %v1693
    %v1695 = vmul.f32 %v1694, 2.0
    %v1696 = vsub.f32 %v1695, 1.0
    %v1697 = vmul.f32 %v1694, %v1519
    %1699 = vrot.lane.b32.xlu0 %v1696, 64
    %v1700 = vpop.permute.xlu0 %1699
    %v1702 = vmul.f32 %v1694, %v1700
    %1704 = vrot.lane.b32.xlu0 %v1702, 32
    %v1705 = vpop.permute.xlu0 %1704
    %v1707 = vadd.f32 %v1697, %v1705
    %v1708 = vtanh.pop %v1707
    %1710 = vrot.lane.b32.xlu0 %v1708, 64
    %v1711 = vpop.permute.xlu0 %1710
    %v1713 = vmul.f32 %v1694, %v1711
    %v1714 = vpack.c.bf16 %v1713, %v1713
    %v1715 = vpack.c.bf16 %v1645, %v1645
    %1717 = vrot.lane.b32.xlu0 %v1715, 32
    %v1718 = vpop.permute.xlu0 %1717
    %v1720 = vsel %vm213, %v1718, 0
    %1722 = vmatprep.subr.bf16.mxu0 0
    %1723 = vmatpush1.bf16.msra.mxu0 0
    %1724 = vmatprep.subr.bf16.mxu0 0
    %1725 = vmatpush1.bf16.msra.mxu0 0
    %1726 = vmatprep.subr.bf16.mxu0 0
    %1727 = vmatpush1.bf16.msra.mxu0 0
    %1728 = vmatprep.subr.bf16.mxu0 0
    %1729 = vmatpush1.bf16.msra.mxu0 0
    %1730 = vmatprep.subr.bf16.mxu0 0
    %1731 = vmatpush1.bf16.msra.mxu0 0
    %1732 = vmatprep.subr.bf16.mxu0 0
    %1733 = vmatpush1.bf16.msra.mxu0 0
    %1734 = vmatprep.subr.bf16.mxu0 0
    %1735 = vmatpush1.bf16.msra.mxu0 %v391
    %1736 = vmatprep.subr.bf16.mxu0 0
    %1737 = vmatpush1.bf16.msra.mxu0 %v390
    %1738 = vmatprep.subr.bf16.mxu0 0
    %1739 = vmatpush2.bf16.msra.mxu0 0
    %1740 = vmatprep.subr.bf16.mxu0 0
    %1741 = vmatpush2.bf16.msra.mxu0 0
    %1742 = vmatprep.subr.bf16.mxu0 0
    %1743 = vmatpush2.bf16.msra.mxu0 0
    %1744 = vmatprep.subr.bf16.mxu0 0
    %1745 = vmatpush2.bf16.msra.mxu0 0
    %1746 = vmatprep.subr.bf16.mxu0 0
    %1747 = vmatpush2.bf16.msra.mxu0 0
    %1748 = vmatprep.subr.bf16.mxu0 0
    %1749 = vmatpush2.bf16.msra.mxu0 0
    %1750 = vmatprep.subr.bf16.mxu0 0
    %1751 = vmatpush2.bf16.msra.mxu0 0
    %1752 = vmatprep.subr.bf16.mxu0 0
    %1753 = vmatpush2.bf16.msra.mxu0 0
    %1754 = vmatprep.mubr.bf16.mxu0 0
    %1755 = vmatmul.mubr.bf16.gmra.mxu0 %v1720
    %v1756 = vpop.f32.mrf.mxu0
    %v1757 = vadd.f32 0.0, %v1756
    %v1758 = vpop.f32.mrf.mxu0
    %v1759 = vpop.f32.mrf.mxu0
    %v1760 = vpop.f32.mrf.mxu0
    %1761 = vdwg.mxu0
    %1763 = vrot.lane.b32.xlu0 %v1714, 32
    %v1764 = vpop.permute.xlu0 %1763
    %v1766 = vsel %vm213, %v1764, 0
    %1768 = vmatprep.subr.bf16.mxu0 0
    %1769 = vmatpush1.bf16.msra.mxu0 0
    %1770 = vmatprep.subr.bf16.mxu0 0
    %1771 = vmatpush1.bf16.msra.mxu0 0
    %1772 = vmatprep.subr.bf16.mxu0 0
    %1773 = vmatpush1.bf16.msra.mxu0 0
    %1774 = vmatprep.subr.bf16.mxu0 0
    %1775 = vmatpush1.bf16.msra.mxu0 0
    %1776 = vmatprep.subr.bf16.mxu0 0
    %1777 = vmatpush1.bf16.msra.mxu0 0
    %1778 = vmatprep.subr.bf16.mxu0 0
    %1779 = vmatpush1.bf16.msra.mxu0 0
    %1780 = vmatprep.subr.bf16.mxu0 0
    %1781 = vmatpush1.bf16.msra.mxu0 %v446
    %1782 = vmatprep.subr.bf16.mxu0 0
    %1783 = vmatpush1.bf16.msra.mxu0 %v445
    %1784 = vmatprep.subr.bf16.mxu0 0
    %1785 = vmatpush2.bf16.msra.mxu0 0
    %1786 = vmatprep.subr.bf16.mxu0 0
    %1787 = vmatpush2.bf16.msra.mxu0 0
    %1788 = vmatprep.subr.bf16.mxu0 0
    %1789 = vmatpush2.bf16.msra.mxu0 0
    %1790 = vmatprep.subr.bf16.mxu0 0
    %1791 = vmatpush2.bf16.msra.mxu0 0
    %1792 = vmatprep.subr.bf16.mxu0 0
    %1793 = vmatpush2.bf16.msra.mxu0 0
    %1794 = vmatprep.subr.bf16.mxu0 0
    %1795 = vmatpush2.bf16.msra.mxu0 0
    %1796 = vmatprep.subr.bf16.mxu0 0
    %1797 = vmatpush2.bf16.msra.mxu0 0
    %1798 = vmatprep.subr.bf16.mxu0 0
    %1799 = vmatpush2.bf16.msra.mxu0 0
    %1800 = vmatprep.mubr.bf16.mxu0 0
    %1801 = vmatmul.mubr.bf16.gmra.mxu0 %v1766
    %v1802 = vpop.f32.mrf.mxu0
    %v1803 = vadd.f32 %v1757, %v1802
    %v1804 = vpop.f32.mrf.mxu0
    %v1805 = vpop.f32.mrf.mxu0
    %v1806 = vpop.f32.mrf.mxu0
    %1807 = vdwg.mxu0
    %v1808 = vadd.f32 %v1803, %v160
    %v1809 = vxor.u32 %v1808, 2147483648
    %v1810 = vmul.f32 %v1809, 1.442695
    %v1811 = vpow.pop %v1810
    %v1812 = vadd.f32 %v1811, 1.0
    %v1813 = vrcp.pop %v1812
    %v1814 = vmul.f32 1.0, %v1813
    %v1815 = vmul.f32 %v1814, 2.0
    %v1816 = vsub.f32 %v1815, 1.0
    %v1817 = vmul.f32 %v1814, %v1639
    %1819 = vrot.lane.b32.xlu0 %v1816, 64
    %v1820 = vpop.permute.xlu0 %1819
    %v1822 = vmul.f32 %v1814, %v1820
    %1824 = vrot.lane.b32.xlu0 %v1822, 32
    %v1825 = vpop.permute.xlu0 %1824
    %v1827 = vadd.f32 %v1817, %v1825
    %v1828 = vtanh.pop %v1827
    %1830 = vrot.lane.b32.xlu0 %v1828, 64
    %v1831 = vpop.permute.xlu0 %1830
    %v1833 = vmul.f32 %v1814, %v1831
    %v1834 = vpack.c.bf16 %v1833, %v1833
    %v1835 = vld [vmem:[#allocation14] sm:$0xf]
    %v1836 = vld [vmem:[#allocation14 + $0x4] sm:$0xf]
    %v1837 = vld [vmem:[#allocation14 + $0x8] sm:$0xf]
    %v1838 = vld [vmem:[#allocation14 + $0xc] sm:$0xf]
    %v1839 = vld [vmem:[#allocation15] sm:$0x1]
    %v1841 = vlaneseq
    %v1842 = vshrl.u32 %v1841, 7
    %v1843 = vsub.s32 0, %v1842
    %v1844 = vrot.slane %v1839, %v1843
    %1847 = vrot.lane.b32.xlu0 %v1834, 32
    %v1848 = vpop.permute.xlu0 %1847
    %v1853 = vunpack.c.l.b16 %v1835
    %v1854 = vunpack.c.l.b16 %v1836
    %v1855 = vunpack.c.l.b16 %v1837
    %v1856 = vunpack.c.l.b16 %v1838
    %v1857 = vpack.c.b16 %v1854, %v1853
    %v1858 = vpack.c.b16 %v1856, %v1855
    %v1862 = vsel %vm213, %v1848, 0
    %1864 = vmatprep.subr.bf16.mxu0 0
    %1865 = vmatpush1.bf16.msra.mxu0 0
    %1866 = vmatprep.subr.bf16.mxu0 0
    %1867 = vmatpush1.bf16.msra.mxu0 0
    %1868 = vmatprep.subr.bf16.mxu0 0
    %1869 = vmatpush1.bf16.msra.mxu0 0
    %1870 = vmatprep.subr.bf16.mxu0 0
    %1871 = vmatpush1.bf16.msra.mxu0 0
    %1872 = vmatprep.subr.bf16.mxu0 0
    %1873 = vmatpush1.bf16.msra.mxu0 0
    %1874 = vmatprep.subr.bf16.mxu0 0
    %1875 = vmatpush1.bf16.msra.mxu0 0
    %1876 = vmatprep.subr.bf16.mxu0 0
    %1877 = vmatpush1.bf16.msra.mxu0 %v1858
    %1878 = vmatprep.subr.bf16.mxu0 0
    %1879 = vmatpush1.bf16.msra.mxu0 %v1857
    %1880 = vmatprep.subr.bf16.mxu0 0
    %1881 = vmatpush2.bf16.msra.mxu0 0
    %1882 = vmatprep.subr.bf16.mxu0 0
    %1883 = vmatpush2.bf16.msra.mxu0 0
    %1884 = vmatprep.subr.bf16.mxu0 0
    %1885 = vmatpush2.bf16.msra.mxu0 0
    %1886 = vmatprep.subr.bf16.mxu0 0
    %1887 = vmatpush2.bf16.msra.mxu0 0
    %1888 = vmatprep.subr.bf16.mxu0 0
    %1889 = vmatpush2.bf16.msra.mxu0 0
    %1890 = vmatprep.subr.bf16.mxu0 0
    %1891 = vmatpush2.bf16.msra.mxu0 0
    %1892 = vmatprep.subr.bf16.mxu0 0
    %1893 = vmatpush2.bf16.msra.mxu0 0
    %1894 = vmatprep.subr.bf16.mxu0 0
    %1895 = vmatpush2.bf16.msra.mxu0 0
    %1896 = vmatprep.mubr.bf16.mxu0 0
    %1897 = vmatmul.mubr.bf16.gmra.mxu0 %v1862
    %v1898 = vpop.f32.mrf.mxu0
    %v1899 = vadd.f32 %v1844, %v1898
    %v1900 = vpop.f32.mrf.mxu0
    %v1901 = vpop.f32.mrf.mxu0
    %v1902 = vpop.f32.mrf.mxu0
    %1903 = vdwg.mxu0
    %v1904 = vmax.f32 %v1899, 0.0
    %v1905 = vpack.c.bf16 %v1904, %v1904
    %v1906 = vld [vmem:[%s9] sm:$0xf]
    %v1907 = vld [vmem:[%s9 + $0x4] sm:$0xf]
    %v1908 = vld [vmem:[%s9 + $0x8] sm:$0xf]
    %v1909 = vld [vmem:[%s9 + $0xc] sm:$0xf]
    %v1910 = vld [vmem:[%s9 + $0x10] sm:$0xf]
    %v1911 = vld [vmem:[%s9 + $0x14] sm:$0xf]
    %v1912 = vld [vmem:[%s9 + $0x18] sm:$0xf]
    %v1913 = vld [vmem:[%s9 + $0x1c] sm:$0xf]
    %v1914 = vld [vmem:[%s9 + $0x20] sm:$0xf]
    %v1915 = vld [vmem:[%s9 + $0x24] sm:$0xf]
    %v1916 = vld [vmem:[%s9 + $0x28] sm:$0xf]
    %v1917 = vld [vmem:[%s9 + $0x2c] sm:$0xf]
    %v1918 = vld [vmem:[%s9 + $0x30] sm:$0xf]
    %v1919 = vld [vmem:[%s9 + $0x34] sm:$0xf]
    %v1920 = vld [vmem:[%s9 + $0x38] sm:$0xf]
    %v1921 = vld [vmem:[%s9 + $0x3c] sm:$0xf]
    %v1922 = vld [vmem:[%s10] sm:$0x1]
    %v1924 = vlaneseq
    %v1925 = vshrl.u32 %v1924, 7
    %v1926 = vsub.s32 0, %v1925
    %v1927 = vrot.slane %v1922, %v1926
    %v1945 = vunpack.c.l.b16 %v1906
    %v1946 = vunpack.c.l.b16 %v1907
    %v1947 = vunpack.c.l.b16 %v1908
    %v1948 = vunpack.c.l.b16 %v1909
    %v1949 = vunpack.c.l.b16 %v1910
    %v1950 = vunpack.c.l.b16 %v1911
    %v1951 = vunpack.c.l.b16 %v1912
    %v1952 = vunpack.c.l.b16 %v1913
    %v1953 = vunpack.c.l.b16 %v1914
    %v1954 = vunpack.c.l.b16 %v1915
    %v1955 = vunpack.c.l.b16 %v1916
    %v1956 = vunpack.c.l.b16 %v1917
    %v1957 = vunpack.c.l.b16 %v1918
    %v1958 = vunpack.c.l.b16 %v1919
    %v1959 = vunpack.c.l.b16 %v1920
    %v1960 = vunpack.c.l.b16 %v1921
    %v1961 = vpack.c.b16 %v1946, %v1945
    %v1962 = vpack.c.b16 %v1948, %v1947
    %v1963 = vpack.c.b16 %v1950, %v1949
    %v1964 = vpack.c.b16 %v1952, %v1951
    %v1965 = vpack.c.b16 %v1954, %v1953
    %v1966 = vpack.c.b16 %v1956, %v1955
    %v1967 = vpack.c.b16 %v1958, %v1957
    %v1968 = vpack.c.b16 %v1960, %v1959
    %1977 = vmatprep.subr.bf16.mxu0 0
    %1978 = vmatpush1.bf16.msra.mxu0 %v1968
    %1979 = vmatprep.subr.bf16.mxu0 0
    %1980 = vmatpush1.bf16.msra.mxu0 %v1967
    %1981 = vmatprep.subr.bf16.mxu0 0
    %1982 = vmatpush1.bf16.msra.mxu0 %v1966
    %1983 = vmatprep.subr.bf16.mxu0 0
    %1984 = vmatpush1.bf16.msra.mxu0 %v1965
    %1985 = vmatprep.subr.bf16.mxu0 0
    %1986 = vmatpush1.bf16.msra.mxu0 %v1964
    %1987 = vmatprep.subr.bf16.mxu0 0
    %1988 = vmatpush1.bf16.msra.mxu0 %v1963
    %1989 = vmatprep.subr.bf16.mxu0 0
    %1990 = vmatpush1.bf16.msra.mxu0 %v1962
    %1991 = vmatprep.subr.bf16.mxu0 0
    %1992 = vmatpush1.bf16.msra.mxu0 %v1961
    %1993 = vmatprep.subr.bf16.mxu0 0
    %1994 = vmatpush2.bf16.msra.mxu0 0
    %1995 = vmatprep.subr.bf16.mxu0 0
    %1996 = vmatpush2.bf16.msra.mxu0 0
    %1997 = vmatprep.subr.bf16.mxu0 0
    %1998 = vmatpush2.bf16.msra.mxu0 0
    %1999 = vmatprep.subr.bf16.mxu0 0
    %2000 = vmatpush2.bf16.msra.mxu0 0
    %2001 = vmatprep.subr.bf16.mxu0 0
    %2002 = vmatpush2.bf16.msra.mxu0 0
    %2003 = vmatprep.subr.bf16.mxu0 0
    %2004 = vmatpush2.bf16.msra.mxu0 0
    %2005 = vmatprep.subr.bf16.mxu0 0
    %2006 = vmatpush2.bf16.msra.mxu0 0
    %2007 = vmatprep.subr.bf16.mxu0 0
    %2008 = vmatpush2.bf16.msra.mxu0 0
    %2009 = vmatprep.mubr.bf16.mxu0 0
    %2010 = vmatmul.mubr.bf16.gmra.mxu0 %v1905
    %v2011 = vpop.f32.mrf.mxu0
    %v2012 = vadd.f32 %v1927, %v2011
    %v2013 = vpop.f32.mrf.mxu0
    %v2014 = vpop.f32.mrf.mxu0
    %v2015 = vpop.f32.mrf.mxu0
    %2016 = vdwg.mxu0
    %2017 = vst [vmem:[#allocation17] sm:$0xff] %v2012
    // Predicated region
    $region78: #{tpu_custom_call.1} parent=1 // pred_check
      _
    $region79: #{tpu_custom_call.1} parent=1 // pred_check_branch
      %2019 = sbr.rel (0) target = $region81
    $region80: #{tpu_custom_call.1} parent=1 // pred_region
      %s2021 = ssub.s32 128, 128
      %2022 = vsyncadd [#allocation5], %s2021
      %s2024 = sshll.u32 [#allocation17], 4
      %s2025 = int_to_ptr.vmem [resolvable:$true] %s2024
      %2027 = dma.vmem_to_hbm [thread:$0]  %s2025, 128, %s11, [#allocation5]
    $region81: #{tpu_custom_call.1} parent=1 // pred_fallthru
      _
    // Predicated region
    $region82: #{tpu_custom_call.1} parent=1 // pred_check
      _
    $region83: #{tpu_custom_call.1} parent=1 // pred_check_branch
      %2029 = sbr.rel (0) target = $region85
    $region84: #{tpu_custom_call.1} parent=1 // pred_region
      %2030 = dma.done [#allocation5], 128
    $region85: #{tpu_custom_call.1} parent=1 // pred_fallthru
      _
    %2031 = vsyncpa [#allocation4], 1
    %2032 = vsyncpa [#allocation7], 1
    %2033 = vsyncpa [#allocation10], 1
    %2034 = vsyncpa [#allocation13], 1
    %2035 = vsyncpa [#allocation16], 1
    %2036 = vsyncpa [#allocation5], 1

</llo_original>
